<compile_context>
chip_gen: v7x
topology: tpu7x:2x2x1
jax: 0.10.0
libtpu: 0.0.40
codegen_flags: <defaults>
</compile_context>

<pallas_src>
import jax
import jax.numpy as jnp
from jax.experimental import pallas as pl
from jax.experimental.pallas import tpu as pltpu

HID = 256
N_HIDDEN = 5  # number of Linear(256,256)+Tanh layers after the first layer


def _round_up(a, m):
    return ((a + m - 1) // m) * m


def _bf16_tanh_supported():
    # v6e / v7x have a bf16-capable EUP; v5e (and older generations) do not, so
    # keep the tanh in f32 there.  Perf-only decision, never a correctness one.
    try:
        kind = jax.devices()[0].device_kind.lower()
    except Exception:
        return True
    return not any(tag in kind for tag in ("v2", "v3", "v4", "v5"))


def _make_kernel(bf16_tanh: bool):
    def kernel(x_ref, w1_ref, b1_ref, wh_ref, bh_ref, w7_ref, b7_ref, o_ref):
        x = x_ref[...]                                      # (TB, 2) f32

        # Layer 1: Linear(4,256) + Tanh on the VPU.  The batch-mean half of the
        # concat feature is already folded into b1_ref, so only the two real
        # input columns remain (broadcast-FMAs; a K=2 matmul would waste the MXU).
        acc = (x[:, 0:1] * w1_ref[0:1, :]
               + x[:, 1:2] * w1_ref[1:2, :]
               + b1_ref[...])                               # (TB, 256) f32
        h = jnp.tanh(acc).astype(jnp.bfloat16)              # (TB, 256) bf16

        # 5 x (Linear(256,256) + Tanh): bf16 operands on the MXU, f32 accumulate.
        for l in range(N_HIDDEN):
            z = jnp.dot(h, wh_ref[l], preferred_element_type=jnp.float32) + bh_ref[l]
            if bf16_tanh:
                h = jnp.tanh(z.astype(jnp.bfloat16))        # bf16 EUP (v6e/v7x)
            else:
                h = jnp.tanh(z).astype(jnp.bfloat16)        # f32 EUP (v5e/older)

        # Final Linear(256,1): VPU multiply + XLU lane reduction (avoid a 1-of-256
        # MXU output column); scalar bias read from SMEM.  The tile's logits are
        # stored as a lane-dense (1, TB) row slab instead of a (TB, 1) column.
        hf = h.astype(jnp.float32)
        logits = jnp.sum(hf * w7_ref[...], axis=-1) + b7_ref[0, 0]   # (TB,)
        o_ref[...] = logits[None, :].astype(o_ref.dtype)             # (1, TB)

    return kernel


def mog_netD_improved_forward(x, params, *, tile_b=1024):
    """x: (B, 2) float32. Returns (B, 1) float32."""
    w1, b1, wh, bh, w7r, b7 = params
    B = x.shape[0]

    # TODO(synk): the batch mean is a cross-batch reduction, so it is computed in
    # the wrapper; per the review it is folded into the layer-1 bias instead of
    # materializing the (B, 4) concat feature:
    #   tanh([x, mean] @ W1 + b1) == tanh(x @ W1[:2] + (b1 + mean @ W1[2:]))
    mean = jnp.mean(x, axis=0, keepdims=True)                           # (1, 2)
    b1_eff = b1 + jnp.dot(mean, w1[2:4, :],
                          precision=jax.lax.Precision.HIGHEST)          # (1, 256)
    w1_top = w1[0:2, :]                                                 # (2, 256)

    # Hidden weights in bf16: MXU-native on v5e/v6e/v7x and half the weight DMA.
    wh_bf16 = wh.astype(jnp.bfloat16)

    # Batch tiling: one tile for small B; otherwise >=2 lane-aligned (multiple of
    # 128) tiles so both v7x TensorCores run, capped at ~tile_b rows per step.
    B8 = _round_up(B, 8)
    if B8 <= 256:
        tb = B8
    else:
        tb = min(_round_up(int(tile_b), 128),
                 max(128, _round_up(pl.cdiv(B8, 2), 128)))
    b_pad = _round_up(B, tb)
    x_p = jnp.pad(x, ((0, b_pad - B), (0, 0))) if b_pad != B else x
    grid = (b_pad // tb,)

    weight_bytes = ((w1_top.size + b1_eff.size + bh.size + w7r.size + b7.size) * 4
                    + wh_bf16.size * 2)
    cost = pl.CostEstimate(
        flops=2 * b_pad * (2 * HID + N_HIDDEN * HID * HID + HID),
        transcendentals=b_pad * (N_HIDDEN + 1) * HID,
        bytes_accessed=int(x_p.size * 4 + b_pad * 4 + weight_bytes),
    )

    out_row = pl.pallas_call(
        _make_kernel(_bf16_tanh_supported()),
        out_shape=jax.ShapeDtypeStruct((1, b_pad), jnp.float32),
        grid_spec=pltpu.PrefetchScalarGridSpec(
            num_scalar_prefetch=0,
            grid=grid,
            in_specs=[
                pl.BlockSpec((tb, 2), lambda i: (i, 0)),                  # x tile
                pl.BlockSpec((2, HID), lambda i: (0, 0)),                 # W1[:2]
                pl.BlockSpec((1, HID), lambda i: (0, 0)),                 # b1 (+mean term)
                pl.BlockSpec((N_HIDDEN, HID, HID), lambda i: (0, 0, 0)),  # W2..W6 bf16
                pl.BlockSpec((N_HIDDEN, 1, HID), lambda i: (0, 0, 0)),    # b2..b6
                pl.BlockSpec((1, HID), lambda i: (0, 0)),                 # W7 (row)
                pl.BlockSpec(memory_space=pltpu.MemorySpace.SMEM),        # b7 scalar
            ],
            out_specs=pl.BlockSpec((1, tb), lambda i: (0, i)),            # lane-dense
        ),
        compiler_params=pltpu.CompilerParams(
            dimension_semantics=("parallel",),
        ),
        cost_estimate=cost,
    )(x_p, w1_top, b1_eff, wh_bf16, bh, w7r, b7)

    # Drop padded rows; PyTorch forward ends with .view(-1, 1).
    return out_row.reshape(-1)[:B].reshape(-1, 1)


def init_params(key):
    """Synthetic init matching nn.Linear shapes, stored as (in, out)."""
    ks = jax.random.split(key, 6)
    w1 = jax.random.normal(ks[0], (4, HID), jnp.float32) * 0.5
    b1 = jax.random.normal(ks[1], (1, HID), jnp.float32) * 0.1
    wh = jax.random.normal(ks[2], (N_HIDDEN, HID, HID), jnp.float32) * (1.0 / 16.0)
    bh = jax.random.normal(ks[3], (N_HIDDEN, 1, HID), jnp.float32) * 0.1
    w7r = jax.random.normal(ks[4], (1, HID), jnp.float32) * 0.1   # W7 stored as a row
    b7 = jax.random.normal(ks[5], (1, 1), jnp.float32) * 0.1
    return (w1, b1, wh, bh, w7r, b7)


def reference_forward(x, params):
    """Pure-JAX f32 reference matching the PyTorch module exactly."""
    w1, b1, wh, bh, w7r, b7 = params
    hp = jax.lax.Precision.HIGHEST
    mean = jnp.mean(x, axis=0, keepdims=True)
    h = jnp.concatenate([x, jnp.broadcast_to(mean, x.shape)], axis=1)
    h = jnp.tanh(jnp.dot(h, w1, precision=hp) + b1)
    for l in range(N_HIDDEN):
        h = jnp.tanh(jnp.dot(h, wh[l], precision=hp) + bh[l])
    out = jnp.dot(h, w7r.T, precision=hp) + b7
    return out.reshape(-1, 1)


if __name__ == "__main__":
    key = jax.random.PRNGKey(0)
    kx, kp = jax.random.split(key)
    B = 64
    x = jax.random.normal(kx, (B, 2), jnp.float32)
    params = init_params(kp)

    out = mog_netD_improved_forward(x, params)
    out = jax.block_until_ready(out)

    ref = reference_forward(x, params)
    assert out.shape == (B, 1)
    # Hidden matmuls (and tanh on v6e/v7x) run in bf16 per the perf review, so the
    # tolerance vs the f32 HIGHEST-precision reference is relaxed (~1e-2 relative).
    assert jnp.allclose(out, ref, atol=1e-1, rtol=5e-2), "mismatch vs JAX reference"
    print("KERNEL_OK")
</pallas_src>

<mosaic_0001>
module attributes {stable_mosaic.version = 11 : i64} {
  func.func @kernel(%arg0: i32, %arg1: memref<64x2xf32, #tpu.memory_space<vmem>>, %arg2: memref<2x256xf32, #tpu.memory_space<vmem>>, %arg3: memref<1x256xf32, #tpu.memory_space<vmem>>, %arg4: memref<5x256x256xbf16, #tpu.memory_space<vmem>>, %arg5: memref<5x1x256xf32, #tpu.memory_space<vmem>>, %arg6: memref<1x256xf32, #tpu.memory_space<vmem>>, %arg7: memref<1x1xf32, #tpu.memory_space<smem>>, %arg8: memref<1x64xf32, #tpu.memory_space<vmem>>) attributes {dimension_semantics = [#tpu.dimension_semantics<parallel>], iteration_bounds = array<i64: 1>, scalar_prefetch = 0 : i64, scratch_operands = 0 : i64, tpu.core_type = #tpu.core_type<tc>, window_params = [{transform_indices = @transform_0, window_bounds = array<i64: 64, 2>}, {pipeline_mode = #tpu.pipeline_mode<synchronous>, transform_indices = @transform_1, window_bounds = array<i64: 2, 256>}, {pipeline_mode = #tpu.pipeline_mode<synchronous>, transform_indices = @transform_2, window_bounds = array<i64: 1, 256>}, {pipeline_mode = #tpu.pipeline_mode<synchronous>, transform_indices = @transform_3, window_bounds = array<i64: 5, 256, 256>}, {pipeline_mode = #tpu.pipeline_mode<synchronous>, transform_indices = @transform_4, window_bounds = array<i64: 5, 1, 256>}, {pipeline_mode = #tpu.pipeline_mode<synchronous>, transform_indices = @transform_5, window_bounds = array<i64: 1, 256>}, {transform_indices = @transform_6, window_bounds = array<i64: 1, 1>}, {transform_indices = @transform_7, window_bounds = array<i64: 1, 64>}]} {
    %c0 = arith.constant 0 : index
    %c0_0 = arith.constant 0 : index
    %0 = vector.load %arg1[%c0, %c0_0] : memref<64x2xf32, #tpu.memory_space<vmem>>, vector<64x2xf32>
    %1 = vector.extract_strided_slice %0 {offsets = [0, 0], sizes = [64, 1], strides = [1, 1]} : vector<64x2xf32> to vector<64x1xf32>
    %c0_1 = arith.constant 0 : index
    %c0_2 = arith.constant 0 : index
    %2 = vector.load %arg2[%c0_1, %c0_2] : memref<2x256xf32, #tpu.memory_space<vmem>>, vector<1x256xf32>
    %3 = vector.broadcast %1 : vector<64x1xf32> to vector<64x256xf32>
    %4 = vector.broadcast %2 : vector<1x256xf32> to vector<64x256xf32>
    %5 = arith.mulf %3, %4 : vector<64x256xf32>
    %6 = vector.extract_strided_slice %0 {offsets = [0, 1], sizes = [64, 1], strides = [1, 1]} : vector<64x2xf32> to vector<64x1xf32>
    %c1 = arith.constant 1 : index
    %c0_3 = arith.constant 0 : index
    %7 = vector.load %arg2[%c1, %c0_3] : memref<2x256xf32, #tpu.memory_space<vmem>>, vector<1x256xf32>
    %8 = vector.broadcast %6 : vector<64x1xf32> to vector<64x256xf32>
    %9 = vector.broadcast %7 : vector<1x256xf32> to vector<64x256xf32>
    %10 = arith.mulf %8, %9 : vector<64x256xf32>
    %11 = arith.addf %5, %10 : vector<64x256xf32>
    %c0_4 = arith.constant 0 : index
    %c0_5 = arith.constant 0 : index
    %12 = vector.load %arg3[%c0_4, %c0_5] : memref<1x256xf32, #tpu.memory_space<vmem>>, vector<1x256xf32>
    %13 = vector.broadcast %12 : vector<1x256xf32> to vector<64x256xf32>
    %14 = arith.addf %11, %13 : vector<64x256xf32>
    %15 = math.tanh %14 : vector<64x256xf32>
    %16 = arith.truncf %15 : vector<64x256xf32> to vector<64x256xbf16>
    %c0_6 = arith.constant 0 : index
    %c0_7 = arith.constant 0 : index
    %c0_8 = arith.constant 0 : index
    %17 = vector.load %arg4[%c0_6, %c0_7, %c0_8] : memref<5x256x256xbf16, #tpu.memory_space<vmem>>, vector<1x256x256xbf16>
    %18 = vector.shape_cast %17 : vector<1x256x256xbf16> to vector<256x256xbf16>
    %cst = arith.constant dense<0.000000e+00> : vector<64x256xf32>
    %19 = tpu.matmul %16, %18, %cst {dimension_numbers = #tpu.dot_dimension_numbers<[1], [0], [0], [1], [0, 0, 1, 1], [], []>} : vector<64x256xbf16>, vector<256x256xbf16>, vector<64x256xf32> -> vector<64x256xf32>
    %c0_9 = arith.constant 0 : index
    %c0_10 = arith.constant 0 : index
    %c0_11 = arith.constant 0 : index
    %20 = vector.load %arg5[%c0_9, %c0_10, %c0_11] : memref<5x1x256xf32, #tpu.memory_space<vmem>>, vector<1x1x256xf32>
    %21 = vector.shape_cast %20 : vector<1x1x256xf32> to vector<1x256xf32>
    %22 = vector.broadcast %21 : vector<1x256xf32> to vector<64x256xf32>
    %23 = arith.addf %19, %22 : vector<64x256xf32>
    %24 = arith.truncf %23 : vector<64x256xf32> to vector<64x256xbf16>
    %25 = math.tanh %24 : vector<64x256xbf16>
    %c1_12 = arith.constant 1 : index
    %c0_13 = arith.constant 0 : index
    %c0_14 = arith.constant 0 : index
    %26 = vector.load %arg4[%c1_12, %c0_13, %c0_14] : memref<5x256x256xbf16, #tpu.memory_space<vmem>>, vector<1x256x256xbf16>
    %27 = vector.shape_cast %26 : vector<1x256x256xbf16> to vector<256x256xbf16>
    %cst_15 = arith.constant dense<0.000000e+00> : vector<64x256xf32>
    %28 = tpu.matmul %25, %27, %cst_15 {dimension_numbers = #tpu.dot_dimension_numbers<[1], [0], [0], [1], [0, 0, 1, 1], [], []>} : vector<64x256xbf16>, vector<256x256xbf16>, vector<64x256xf32> -> vector<64x256xf32>
    %c1_16 = arith.constant 1 : index
    %c0_17 = arith.constant 0 : index
    %c0_18 = arith.constant 0 : index
    %29 = vector.load %arg5[%c1_16, %c0_17, %c0_18] : memref<5x1x256xf32, #tpu.memory_space<vmem>>, vector<1x1x256xf32>
    %30 = vector.shape_cast %29 : vector<1x1x256xf32> to vector<1x256xf32>
    %31 = vector.broadcast %30 : vector<1x256xf32> to vector<64x256xf32>
    %32 = arith.addf %28, %31 : vector<64x256xf32>
    %33 = arith.truncf %32 : vector<64x256xf32> to vector<64x256xbf16>
    %34 = math.tanh %33 : vector<64x256xbf16>
    %c2 = arith.constant 2 : index
    %c0_19 = arith.constant 0 : index
    %c0_20 = arith.constant 0 : index
    %35 = vector.load %arg4[%c2, %c0_19, %c0_20] : memref<5x256x256xbf16, #tpu.memory_space<vmem>>, vector<1x256x256xbf16>
    %36 = vector.shape_cast %35 : vector<1x256x256xbf16> to vector<256x256xbf16>
    %cst_21 = arith.constant dense<0.000000e+00> : vector<64x256xf32>
    %37 = tpu.matmul %34, %36, %cst_21 {dimension_numbers = #tpu.dot_dimension_numbers<[1], [0], [0], [1], [0, 0, 1, 1], [], []>} : vector<64x256xbf16>, vector<256x256xbf16>, vector<64x256xf32> -> vector<64x256xf32>
    %c2_22 = arith.constant 2 : index
    %c0_23 = arith.constant 0 : index
    %c0_24 = arith.constant 0 : index
    %38 = vector.load %arg5[%c2_22, %c0_23, %c0_24] : memref<5x1x256xf32, #tpu.memory_space<vmem>>, vector<1x1x256xf32>
    %39 = vector.shape_cast %38 : vector<1x1x256xf32> to vector<1x256xf32>
    %40 = vector.broadcast %39 : vector<1x256xf32> to vector<64x256xf32>
    %41 = arith.addf %37, %40 : vector<64x256xf32>
    %42 = arith.truncf %41 : vector<64x256xf32> to vector<64x256xbf16>
    %43 = math.tanh %42 : vector<64x256xbf16>
    %c3 = arith.constant 3 : index
    %c0_25 = arith.constant 0 : index
    %c0_26 = arith.constant 0 : index
    %44 = vector.load %arg4[%c3, %c0_25, %c0_26] : memref<5x256x256xbf16, #tpu.memory_space<vmem>>, vector<1x256x256xbf16>
    %45 = vector.shape_cast %44 : vector<1x256x256xbf16> to vector<256x256xbf16>
    %cst_27 = arith.constant dense<0.000000e+00> : vector<64x256xf32>
    %46 = tpu.matmul %43, %45, %cst_27 {dimension_numbers = #tpu.dot_dimension_numbers<[1], [0], [0], [1], [0, 0, 1, 1], [], []>} : vector<64x256xbf16>, vector<256x256xbf16>, vector<64x256xf32> -> vector<64x256xf32>
    %c3_28 = arith.constant 3 : index
    %c0_29 = arith.constant 0 : index
    %c0_30 = arith.constant 0 : index
    %47 = vector.load %arg5[%c3_28, %c0_29, %c0_30] : memref<5x1x256xf32, #tpu.memory_space<vmem>>, vector<1x1x256xf32>
    %48 = vector.shape_cast %47 : vector<1x1x256xf32> to vector<1x256xf32>
    %49 = vector.broadcast %48 : vector<1x256xf32> to vector<64x256xf32>
    %50 = arith.addf %46, %49 : vector<64x256xf32>
    %51 = arith.truncf %50 : vector<64x256xf32> to vector<64x256xbf16>
    %52 = math.tanh %51 : vector<64x256xbf16>
    %c4 = arith.constant 4 : index
    %c0_31 = arith.constant 0 : index
    %c0_32 = arith.constant 0 : index
    %53 = vector.load %arg4[%c4, %c0_31, %c0_32] : memref<5x256x256xbf16, #tpu.memory_space<vmem>>, vector<1x256x256xbf16>
    %54 = vector.shape_cast %53 : vector<1x256x256xbf16> to vector<256x256xbf16>
    %cst_33 = arith.constant dense<0.000000e+00> : vector<64x256xf32>
    %55 = tpu.matmul %52, %54, %cst_33 {dimension_numbers = #tpu.dot_dimension_numbers<[1], [0], [0], [1], [0, 0, 1, 1], [], []>} : vector<64x256xbf16>, vector<256x256xbf16>, vector<64x256xf32> -> vector<64x256xf32>
    %c4_34 = arith.constant 4 : index
    %c0_35 = arith.constant 0 : index
    %c0_36 = arith.constant 0 : index
    %56 = vector.load %arg5[%c4_34, %c0_35, %c0_36] : memref<5x1x256xf32, #tpu.memory_space<vmem>>, vector<1x1x256xf32>
    %57 = vector.shape_cast %56 : vector<1x1x256xf32> to vector<1x256xf32>
    %58 = vector.broadcast %57 : vector<1x256xf32> to vector<64x256xf32>
    %59 = arith.addf %55, %58 : vector<64x256xf32>
    %60 = arith.truncf %59 : vector<64x256xf32> to vector<64x256xbf16>
    %61 = math.tanh %60 : vector<64x256xbf16>
    %62 = arith.extf %61 : vector<64x256xbf16> to vector<64x256xf32>
    %c0_37 = arith.constant 0 : index
    %c0_38 = arith.constant 0 : index
    %63 = vector.load %arg6[%c0_37, %c0_38] : memref<1x256xf32, #tpu.memory_space<vmem>>, vector<1x256xf32>
    %64 = vector.broadcast %63 : vector<1x256xf32> to vector<64x256xf32>
    %65 = arith.mulf %62, %64 : vector<64x256xf32>
    %cst_39 = arith.constant dense<0.000000e+00> : vector<64xf32>
    %66 = vector.multi_reduction <add>, %65, %cst_39 [1] : vector<64x256xf32> to vector<64xf32>
    %c0_40 = arith.constant 0 : index
    %c0_41 = arith.constant 0 : index
    %67 = memref.load %arg7[%c0_40, %c0_41] : memref<1x1xf32, #tpu.memory_space<smem>>
    %68 = vector.broadcast %67 : f32 to vector<64xf32>
    %69 = arith.addf %66, %68 : vector<64xf32>
    %70 = vector.shape_cast %69 : vector<64xf32> to vector<1x64xf32>
    %c0_42 = arith.constant 0 : index
    %c0_43 = arith.constant 0 : index
    %71 = vector.load %arg8[%c0_42, %c0_43] : memref<1x64xf32, #tpu.memory_space<vmem>>, vector<1x64xf32>
    tpu.vector_store %arg8[%c0_42, %c0_43], %70 {strides = array<i32>} : memref<1x64xf32, #tpu.memory_space<vmem>>, vector<1x64xf32>,
    return
  }
  func.func @transform_0(%arg0: i32) -> (i32, i32) {
    %c0_i32 = arith.constant 0 : i32
    %c0_i32_0 = arith.constant 0 : i32
    return %arg0, %c0_i32 : i32, i32
  }
  func.func @transform_1(%arg0: i32) -> (i32, i32) {
    %c0_i32 = arith.constant 0 : i32
    %c0_i32_0 = arith.constant 0 : i32
    %c0_i32_1 = arith.constant 0 : i32
    return %c0_i32, %c0_i32_0 : i32, i32
  }
  func.func @transform_2(%arg0: i32) -> (i32, i32) {
    %c0_i32 = arith.constant 0 : i32
    %c0_i32_0 = arith.constant 0 : i32
    %c0_i32_1 = arith.constant 0 : i32
    return %c0_i32, %c0_i32_0 : i32, i32
  }
  func.func @transform_3(%arg0: i32) -> (i32, i32, i32) {
    %c0_i32 = arith.constant 0 : i32
    %c0_i32_0 = arith.constant 0 : i32
    %c0_i32_1 = arith.constant 0 : i32
    %c0_i32_2 = arith.constant 0 : i32
    return %c0_i32, %c0_i32_0, %c0_i32_1 : i32, i32, i32
  }
  func.func @transform_4(%arg0: i32) -> (i32, i32, i32) {
    %c0_i32 = arith.constant 0 : i32
    %c0_i32_0 = arith.constant 0 : i32
    %c0_i32_1 = arith.constant 0 : i32
    %c0_i32_2 = arith.constant 0 : i32
    return %c0_i32, %c0_i32_0, %c0_i32_1 : i32, i32, i32
  }
  func.func @transform_5(%arg0: i32) -> (i32, i32) {
    %c0_i32 = arith.constant 0 : i32
    %c0_i32_0 = arith.constant 0 : i32
    %c0_i32_1 = arith.constant 0 : i32
    return %c0_i32, %c0_i32_0 : i32, i32
  }
  func.func @transform_6(%arg0: i32) -> (i32, i32) {
    %c0_i32 = arith.constant 0 : i32
    %c0_i32_0 = arith.constant 0 : i32
    %c0_i32_1 = arith.constant 0 : i32
    return %c0_i32, %c0_i32_0 : i32, i32
  }
  func.func @transform_7(%arg0: i32) -> (i32, i32) {
    %c0_i32 = arith.constant 0 : i32
    %c0_i32_0 = arith.constant 0 : i32
    return %c0_i32, %arg0 : i32, i32
  }
}

</mosaic_0001>

<llo_original>
// kernel: tpu_custom_call.1
$region0: #{tpu_custom_call.1}
  #allocation0 [shape = 'u32[]', space=smem, size = 0x4, offset = 0x4, fixed_abs, tag = 'smem constant byte address 0x4 - core index']
  #allocation1 [shape = 'u32[144,128]{1,0:T(1,128)}', space=vmem, size = 0x12000, scoped, tag = 'internal scratch']
  #allocation2 [shape = 'f32[1,1]{1,0:T(1,128)S(6)}', space=smem, size = 0x200, scoped, tag = 'scoped memory for tpu_custom_call.1']
  %s0 = inlined_call_operand.vmem [shape: f32[64,2], index: 0, kind: input, shape index: {}]
  %s1 = inlined_call_operand.vmem [shape: f32[2,256], index: 1, kind: input, shape index: {}]
  %s2 = inlined_call_operand.vmem [shape: f32[1,256], index: 2, kind: input, shape index: {}]
  %s3 = inlined_call_operand.hbm [shape: bf16[5,256,256], index: 3, kind: input, shape index: {}]
  %s4 = inlined_call_operand.vmem [shape: f32[5,1,256], index: 4, kind: input, shape index: {}]
  %s5 = inlined_call_operand.vmem [shape: f32[1,256], index: 5, kind: input, shape index: {}]
  %s6 = inlined_call_operand.<no memory space> [shape: f32[1,1], index: 6, kind: input, shape index: {}]
  %s7 = inlined_call_operand.hbm [shape: f32[1,64], index: 7, kind: output, shape index: {}]
  %s8 = sld [smem:[#allocation0]]
  $region42: #{tpu_custom_call.1} parent=0
    _
  %s10 = ssub.s32 1, %s8
  %s11 = scalar_select 0, %s10, %s8
  %12 = sst [smem:[#allocation2]] %s6
  $region1: #{tpu_custom_call.1} parent=0
    #allocation3 [shape = 'u8[655360]{0}', space=vmem, size = 0xa0000, scoped, tag = 'input window, operand 3, single buffered']
    #allocation4 [shape = 's32[1]{0}', space=sflag, size = 0x4, scoped, tag = 'scoped memory for tpu_custom_call.1']
    #allocation5 [shape = 's32[1]{0}', space=sflag, size = 0x4, scoped, tag = 'scoped memory for tpu_custom_call.1']
    #allocation6 [shape = 'u8[512]{0}', space=vmem, size = 0x400, scoped, tag = 'output window, operand 0, single buffered']
    %13 = vsyncpa [#allocation4], 0
    %14 = vsyncpa [#allocation5], 0
    // Predicated region
    $region2: #{tpu_custom_call.1} parent=1 // pred_check
      _
    $region3: #{tpu_custom_call.1} parent=1 // pred_check_branch
      %16 = sbr.rel (0) target = $region5
    $region4: #{tpu_custom_call.1} parent=1 // pred_region
      _
    $region5: #{tpu_custom_call.1} parent=1 // pred_fallthru
      _
    // Predicated region
    $region6: #{tpu_custom_call.1} parent=1 // pred_check
      _
    $region7: #{tpu_custom_call.1} parent=1 // pred_check_branch
      %18 = sbr.rel (0) target = $region9
    $region8: #{tpu_custom_call.1} parent=1 // pred_region
      _
    $region9: #{tpu_custom_call.1} parent=1 // pred_fallthru
      _
    // Predicated region
    $region10: #{tpu_custom_call.1} parent=1 // pred_check
      _
    $region11: #{tpu_custom_call.1} parent=1 // pred_check_branch
      %20 = sbr.rel (0) target = $region13
    $region12: #{tpu_custom_call.1} parent=1 // pred_region
      _
    $region13: #{tpu_custom_call.1} parent=1 // pred_fallthru
      _
    // Predicated region
    $region14: #{tpu_custom_call.1} parent=1 // pred_check
      _
    $region15: #{tpu_custom_call.1} parent=1 // pred_check_branch
      %22 = sbr.rel (0) target = $region17
    $region16: #{tpu_custom_call.1} parent=1 // pred_region
      %s24 = ssub.s32 20480, 20480
      %25 = vsyncadd [#allocation4], %s24
      %s26 = sshll.u32 [#allocation3], 4
      %s27 = int_to_ptr.vmem [resolvable:$true] %s26
      %32 = dma.hbm_to_vmem [thread:$0]  %s3, 20480, %s27, [#allocation4], 128, 128, 8
    $region17: #{tpu_custom_call.1} parent=1 // pred_fallthru
      _
    // Predicated region
    $region18: #{tpu_custom_call.1} parent=1 // pred_check
      _
    $region19: #{tpu_custom_call.1} parent=1 // pred_check_branch
      %34 = sbr.rel (0) target = $region21
    $region20: #{tpu_custom_call.1} parent=1 // pred_region
      _
    $region21: #{tpu_custom_call.1} parent=1 // pred_fallthru
      _
    // Predicated region
    $region22: #{tpu_custom_call.1} parent=1 // pred_check
      _
    $region23: #{tpu_custom_call.1} parent=1 // pred_check_branch
      %36 = sbr.rel (0) target = $region25
    $region24: #{tpu_custom_call.1} parent=1 // pred_region
      _
    $region25: #{tpu_custom_call.1} parent=1 // pred_fallthru
      _
    // Predicated region
    $region26: #{tpu_custom_call.1} parent=1 // pred_check
      _
    $region27: #{tpu_custom_call.1} parent=1 // pred_check_branch
      %38 = sbr.rel (0) target = $region29
    $region28: #{tpu_custom_call.1} parent=1 // pred_region
      _
    $region29: #{tpu_custom_call.1} parent=1 // pred_fallthru
      _
    // Predicated region
    $region30: #{tpu_custom_call.1} parent=1 // pred_check
      _
    $region31: #{tpu_custom_call.1} parent=1 // pred_check_branch
      %40 = sbr.rel (0) target = $region33
    $region32: #{tpu_custom_call.1} parent=1 // pred_region
      %41 = dma.done [#allocation4], 20480
    $region33: #{tpu_custom_call.1} parent=1 // pred_fallthru
      _
    %v42 = vld [vmem:[%s0] sm:$0xff]
    %v43 = vld [vmem:[%s0 + $0x8] sm:$0xff]
    %v44 = vld [vmem:[%s0 + $0x10] sm:$0xff]
    %v45 = vld [vmem:[%s0 + $0x18] sm:$0xff]
    %v46 = vld [vmem:[%s0 + $0x20] sm:$0xff]
    %v47 = vld [vmem:[%s0 + $0x28] sm:$0xff]
    %v48 = vld [vmem:[%s0 + $0x30] sm:$0xff]
    %v49 = vld [vmem:[%s0 + $0x38] sm:$0xff]
    %v50 = vld [vmem:[%s1] ss:$2 sm:$0x3]
    %52 = vset.pattern.permute.xlu0 0
    %53 = vperm.xlu0 %52, %v42
    %v54 = vpop.permute.xlu0 %53
    %57 = vset.pattern.permute.xlu0 0
    %58 = vperm.xlu0 %57, %v43
    %v59 = vpop.permute.xlu0 %58
    %62 = vset.pattern.permute.xlu0 0
    %63 = vperm.xlu0 %62, %v44
    %v64 = vpop.permute.xlu0 %63
    %67 = vset.pattern.permute.xlu0 0
    %68 = vperm.xlu0 %67, %v45
    %v69 = vpop.permute.xlu0 %68
    %72 = vset.pattern.permute.xlu0 0
    %73 = vperm.xlu0 %72, %v46
    %v74 = vpop.permute.xlu0 %73
    %77 = vset.pattern.permute.xlu0 0
    %78 = vperm.xlu0 %77, %v47
    %v79 = vpop.permute.xlu0 %78
    %82 = vset.pattern.permute.xlu0 0
    %83 = vperm.xlu0 %82, %v48
    %v84 = vpop.permute.xlu0 %83
    %87 = vset.pattern.permute.xlu0 0
    %88 = vperm.xlu0 %87, %v49
    %v89 = vpop.permute.xlu0 %88
    %v92 = vlaneseq
    %v93 = vshrl.u32 %v92, 7
    %v94 = vsub.s32 0, %v93
    %v95 = vrot.slane %v50, %v94
    %v96 = vlaneseq
    %v97 = vshrl.u32 %v96, 7
    %v98 = vsub.s32 1, %v97
    %v99 = vrot.slane %v50, %v98
    %v102 = vmul.f32 %v54, %v95
    %v103 = vmul.f32 %v54, %v99
    %v104 = vmul.f32 %v59, %v95
    %v105 = vmul.f32 %v59, %v99
    %v106 = vmul.f32 %v64, %v95
    %v107 = vmul.f32 %v64, %v99
    %v108 = vmul.f32 %v69, %v95
    %v109 = vmul.f32 %v69, %v99
    %v110 = vmul.f32 %v74, %v95
    %v111 = vmul.f32 %v74, %v99
    %v112 = vmul.f32 %v79, %v95
    %v113 = vmul.f32 %v79, %v99
    %v114 = vmul.f32 %v84, %v95
    %v115 = vmul.f32 %v84, %v99
    %v116 = vmul.f32 %v89, %v95
    %v117 = vmul.f32 %v89, %v99
    %s118 = scalar_lea.vmem %s1, 1
    %v119 = vld [vmem:[%s118] ss:$2 sm:$0x3]
    %120 = vset.pattern.permute.xlu0 1
    %121 = vperm.xlu0 %120, %v42
    %v122 = vpop.permute.xlu0 %121
    %124 = vset.pattern.permute.xlu0 1
    %125 = vperm.xlu0 %124, %v43
    %v126 = vpop.permute.xlu0 %125
    %128 = vset.pattern.permute.xlu0 1
    %129 = vperm.xlu0 %128, %v44
    %v130 = vpop.permute.xlu0 %129
    %132 = vset.pattern.permute.xlu0 1
    %133 = vperm.xlu0 %132, %v45
    %v134 = vpop.permute.xlu0 %133
    %136 = vset.pattern.permute.xlu0 1
    %137 = vperm.xlu0 %136, %v46
    %v138 = vpop.permute.xlu0 %137
    %140 = vset.pattern.permute.xlu0 1
    %141 = vperm.xlu0 %140, %v47
    %v142 = vpop.permute.xlu0 %141
    %144 = vset.pattern.permute.xlu0 1
    %145 = vperm.xlu0 %144, %v48
    %v146 = vpop.permute.xlu0 %145
    %148 = vset.pattern.permute.xlu0 1
    %149 = vperm.xlu0 %148, %v49
    %v150 = vpop.permute.xlu0 %149
    %v153 = vlaneseq
    %v154 = vshrl.u32 %v153, 7
    %v155 = vsub.s32 0, %v154
    %v156 = vrot.slane %v119, %v155
    %v157 = vlaneseq
    %v158 = vshrl.u32 %v157, 7
    %v159 = vsub.s32 1, %v158
    %v160 = vrot.slane %v119, %v159
    %v163 = vmul.f32 %v122, %v156
    %v164 = vmul.f32 %v122, %v160
    %v165 = vmul.f32 %v126, %v156
    %v166 = vmul.f32 %v126, %v160
    %v167 = vmul.f32 %v130, %v156
    %v168 = vmul.f32 %v130, %v160
    %v169 = vmul.f32 %v134, %v156
    %v170 = vmul.f32 %v134, %v160
    %v171 = vmul.f32 %v138, %v156
    %v172 = vmul.f32 %v138, %v160
    %v173 = vmul.f32 %v142, %v156
    %v174 = vmul.f32 %v142, %v160
    %v175 = vmul.f32 %v146, %v156
    %v176 = vmul.f32 %v146, %v160
    %v177 = vmul.f32 %v150, %v156
    %v178 = vmul.f32 %v150, %v160
    %v179 = vadd.f32 %v102, %v163
    %v180 = vadd.f32 %v103, %v164
    %v181 = vadd.f32 %v104, %v165
    %v182 = vadd.f32 %v105, %v166
    %v183 = vadd.f32 %v106, %v167
    %v184 = vadd.f32 %v107, %v168
    %v185 = vadd.f32 %v108, %v169
    %v186 = vadd.f32 %v109, %v170
    %v187 = vadd.f32 %v110, %v171
    %v188 = vadd.f32 %v111, %v172
    %v189 = vadd.f32 %v112, %v173
    %v190 = vadd.f32 %v113, %v174
    %v191 = vadd.f32 %v114, %v175
    %v192 = vadd.f32 %v115, %v176
    %v193 = vadd.f32 %v116, %v177
    %v194 = vadd.f32 %v117, %v178
    %v195 = vld [vmem:[%s2] sm:$0x3]
    %v197 = vlaneseq
    %v198 = vshrl.u32 %v197, 7
    %v199 = vsub.s32 0, %v198
    %v200 = vrot.slane %v195, %v199
    %v201 = vlaneseq
    %v202 = vshrl.u32 %v201, 7
    %v203 = vsub.s32 1, %v202
    %v204 = vrot.slane %v195, %v203
    %v207 = vadd.f32 %v179, %v200
    %v208 = vadd.f32 %v180, %v204
    %v209 = vadd.f32 %v181, %v200
    %v210 = vadd.f32 %v182, %v204
    %v211 = vadd.f32 %v183, %v200
    %v212 = vadd.f32 %v184, %v204
    %v213 = vadd.f32 %v185, %v200
    %v214 = vadd.f32 %v186, %v204
    %v215 = vadd.f32 %v187, %v200
    %v216 = vadd.f32 %v188, %v204
    %v217 = vadd.f32 %v189, %v200
    %v218 = vadd.f32 %v190, %v204
    %v219 = vadd.f32 %v191, %v200
    %v220 = vadd.f32 %v192, %v204
    %v221 = vadd.f32 %v193, %v200
    %v222 = vadd.f32 %v194, %v204
    %v223 = vtanh.pop %v207
    %v224 = vtanh.pop %v208
    %v225 = vtanh.pop %v209
    %v226 = vtanh.pop %v210
    %v227 = vtanh.pop %v211
    %v228 = vtanh.pop %v212
    %v229 = vtanh.pop %v213
    %v230 = vtanh.pop %v214
    %v231 = vtanh.pop %v215
    %v232 = vtanh.pop %v216
    %v233 = vtanh.pop %v217
    %v234 = vtanh.pop %v218
    %v235 = vtanh.pop %v219
    %v236 = vtanh.pop %v220
    %v237 = vtanh.pop %v221
    %v238 = vtanh.pop %v222
    %v239 = vpack.c.bf16 %v225, %v223
    %v240 = vpack.c.bf16 %v226, %v224
    %v241 = vpack.c.bf16 %v229, %v227
    %v242 = vpack.c.bf16 %v230, %v228
    %v243 = vpack.c.bf16 %v233, %v231
    %v244 = vpack.c.bf16 %v234, %v232
    %v245 = vpack.c.bf16 %v237, %v235
    %v246 = vpack.c.bf16 %v238, %v236
    %v247 = vld [vmem:[#allocation3] sm:$0xff]
    %v248 = vld [vmem:[#allocation3 + $0x8] sm:$0xff]
    %v249 = vld [vmem:[#allocation3 + $0x10] sm:$0xff]
    %v250 = vld [vmem:[#allocation3 + $0x18] sm:$0xff]
    %v251 = vld [vmem:[#allocation3 + $0x20] sm:$0xff]
    %v252 = vld [vmem:[#allocation3 + $0x28] sm:$0xff]
    %v253 = vld [vmem:[#allocation3 + $0x30] sm:$0xff]
    %v254 = vld [vmem:[#allocation3 + $0x38] sm:$0xff]
    %v255 = vld [vmem:[#allocation3 + $0x40] sm:$0xff]
    %v256 = vld [vmem:[#allocation3 + $0x48] sm:$0xff]
    %v257 = vld [vmem:[#allocation3 + $0x50] sm:$0xff]
    %v258 = vld [vmem:[#allocation3 + $0x58] sm:$0xff]
    %v259 = vld [vmem:[#allocation3 + $0x60] sm:$0xff]
    %v260 = vld [vmem:[#allocation3 + $0x68] sm:$0xff]
    %v261 = vld [vmem:[#allocation3 + $0x70] sm:$0xff]
    %v262 = vld [vmem:[#allocation3 + $0x78] sm:$0xff]
    %v263 = vld [vmem:[#allocation3 + $0x80] sm:$0xff]
    %v264 = vld [vmem:[#allocation3 + $0x88] sm:$0xff]
    %v265 = vld [vmem:[#allocation3 + $0x90] sm:$0xff]
    %v266 = vld [vmem:[#allocation3 + $0x98] sm:$0xff]
    %v267 = vld [vmem:[#allocation3 + $0xa0] sm:$0xff]
    %v268 = vld [vmem:[#allocation3 + $0xa8] sm:$0xff]
    %v269 = vld [vmem:[#allocation3 + $0xb0] sm:$0xff]
    %v270 = vld [vmem:[#allocation3 + $0xb8] sm:$0xff]
    %v271 = vld [vmem:[#allocation3 + $0xc0] sm:$0xff]
    %v272 = vld [vmem:[#allocation3 + $0xc8] sm:$0xff]
    %v273 = vld [vmem:[#allocation3 + $0xd0] sm:$0xff]
    %v274 = vld [vmem:[#allocation3 + $0xd8] sm:$0xff]
    %v275 = vld [vmem:[#allocation3 + $0xe0] sm:$0xff]
    %v276 = vld [vmem:[#allocation3 + $0xe8] sm:$0xff]
    %v277 = vld [vmem:[#allocation3 + $0xf0] sm:$0xff]
    %v278 = vld [vmem:[#allocation3 + $0xf8] sm:$0xff]
    %v279 = vld [vmem:[%s4] sm:$0x3]
    %v281 = vlaneseq
    %v282 = vshrl.u32 %v281, 7
    %v283 = vsub.s32 0, %v282
    %v284 = vrot.slane %v279, %v283
    %v285 = vlaneseq
    %v286 = vshrl.u32 %v285, 7
    %v287 = vsub.s32 1, %v286
    %v288 = vrot.slane %v279, %v287
    %v323 = vunpack.c.l.b16 %v247
    %v324 = vunpack.c.h.b16 %v247
    %v325 = vunpack.c.l.b16 %v248
    %v326 = vunpack.c.h.b16 %v248
    %v327 = vunpack.c.l.b16 %v249
    %v328 = vunpack.c.h.b16 %v249
    %v329 = vunpack.c.l.b16 %v250
    %v330 = vunpack.c.h.b16 %v250
    %v331 = vunpack.c.l.b16 %v251
    %v332 = vunpack.c.h.b16 %v251
    %v333 = vunpack.c.l.b16 %v252
    %v334 = vunpack.c.h.b16 %v252
    %v335 = vunpack.c.l.b16 %v253
    %v336 = vunpack.c.h.b16 %v253
    %v337 = vunpack.c.l.b16 %v254
    %v338 = vunpack.c.h.b16 %v254
    %v339 = vunpack.c.l.b16 %v255
    %v340 = vunpack.c.h.b16 %v255
    %v341 = vunpack.c.l.b16 %v256
    %v342 = vunpack.c.h.b16 %v256
    %v343 = vunpack.c.l.b16 %v257
    %v344 = vunpack.c.h.b16 %v257
    %v345 = vunpack.c.l.b16 %v258
    %v346 = vunpack.c.h.b16 %v258
    %v347 = vunpack.c.l.b16 %v259
    %v348 = vunpack.c.h.b16 %v259
    %v349 = vunpack.c.l.b16 %v260
    %v350 = vunpack.c.h.b16 %v260
    %v351 = vunpack.c.l.b16 %v261
    %v352 = vunpack.c.h.b16 %v261
    %v353 = vunpack.c.l.b16 %v262
    %v354 = vunpack.c.h.b16 %v262
    %v355 = vunpack.c.l.b16 %v263
    %v356 = vunpack.c.h.b16 %v263
    %v357 = vunpack.c.l.b16 %v264
    %v358 = vunpack.c.h.b16 %v264
    %v359 = vunpack.c.l.b16 %v265
    %v360 = vunpack.c.h.b16 %v265
    %v361 = vunpack.c.l.b16 %v266
    %v362 = vunpack.c.h.b16 %v266
    %v363 = vunpack.c.l.b16 %v267
    %v364 = vunpack.c.h.b16 %v267
    %v365 = vunpack.c.l.b16 %v268
    %v366 = vunpack.c.h.b16 %v268
    %v367 = vunpack.c.l.b16 %v269
    %v368 = vunpack.c.h.b16 %v269
    %v369 = vunpack.c.l.b16 %v270
    %v370 = vunpack.c.h.b16 %v270
    %v371 = vunpack.c.l.b16 %v271
    %v372 = vunpack.c.h.b16 %v271
    %v373 = vunpack.c.l.b16 %v272
    %v374 = vunpack.c.h.b16 %v272
    %v375 = vunpack.c.l.b16 %v273
    %v376 = vunpack.c.h.b16 %v273
    %v377 = vunpack.c.l.b16 %v274
    %v378 = vunpack.c.h.b16 %v274
    %v379 = vunpack.c.l.b16 %v275
    %v380 = vunpack.c.h.b16 %v275
    %v381 = vunpack.c.l.b16 %v276
    %v382 = vunpack.c.h.b16 %v276
    %v383 = vunpack.c.l.b16 %v277
    %v384 = vunpack.c.h.b16 %v277
    %v385 = vunpack.c.l.b16 %v278
    %v386 = vunpack.c.h.b16 %v278
    %v387 = vpack.c.b16 %v325, %v323
    %v388 = vpack.c.b16 %v326, %v324
    %v389 = vpack.c.b16 %v329, %v327
    %v390 = vpack.c.b16 %v330, %v328
    %v391 = vpack.c.b16 %v333, %v331
    %v392 = vpack.c.b16 %v334, %v332
    %v393 = vpack.c.b16 %v337, %v335
    %v394 = vpack.c.b16 %v338, %v336
    %v395 = vpack.c.b16 %v341, %v339
    %v396 = vpack.c.b16 %v342, %v340
    %v397 = vpack.c.b16 %v345, %v343
    %v398 = vpack.c.b16 %v346, %v344
    %v399 = vpack.c.b16 %v349, %v347
    %v400 = vpack.c.b16 %v350, %v348
    %v401 = vpack.c.b16 %v353, %v351
    %v402 = vpack.c.b16 %v354, %v352
    %v403 = vpack.c.b16 %v357, %v355
    %v404 = vpack.c.b16 %v358, %v356
    %v405 = vpack.c.b16 %v361, %v359
    %v406 = vpack.c.b16 %v362, %v360
    %v407 = vpack.c.b16 %v365, %v363
    %v408 = vpack.c.b16 %v366, %v364
    %v409 = vpack.c.b16 %v369, %v367
    %v410 = vpack.c.b16 %v370, %v368
    %v411 = vpack.c.b16 %v373, %v371
    %v412 = vpack.c.b16 %v374, %v372
    %v413 = vpack.c.b16 %v377, %v375
    %v414 = vpack.c.b16 %v378, %v376
    %v415 = vpack.c.b16 %v381, %v379
    %v416 = vpack.c.b16 %v382, %v380
    %v417 = vpack.c.b16 %v385, %v383
    %v418 = vpack.c.b16 %v386, %v384
    %451 = vmatprep.subr.bf16.mxu0 %v388
    %452 = vmatpush1.bf16.msra.mxu0 %v387
    %453 = vmatprep.subr.bf16.mxu0 %v390
    %454 = vmatpush1.bf16.msra.mxu0 %v389
    %455 = vmatprep.subr.bf16.mxu0 %v392
    %456 = vmatpush1.bf16.msra.mxu0 %v391
    %457 = vmatprep.subr.bf16.mxu0 %v394
    %458 = vmatpush1.bf16.msra.mxu0 %v393
    %459 = vmatprep.subr.bf16.mxu0 %v396
    %460 = vmatpush1.bf16.msra.mxu0 %v395
    %461 = vmatprep.subr.bf16.mxu0 %v398
    %462 = vmatpush1.bf16.msra.mxu0 %v397
    %463 = vmatprep.subr.bf16.mxu0 %v400
    %464 = vmatpush1.bf16.msra.mxu0 %v399
    %465 = vmatprep.subr.bf16.mxu0 %v402
    %466 = vmatpush1.bf16.msra.mxu0 %v401
    %467 = vmatprep.subr.bf16.mxu0 %v404
    %468 = vmatpush1.bf16.msra.mxu0 %v403
    %469 = vmatprep.subr.bf16.mxu0 %v406
    %470 = vmatpush1.bf16.msra.mxu0 %v405
    %471 = vmatprep.subr.bf16.mxu0 %v408
    %472 = vmatpush1.bf16.msra.mxu0 %v407
    %473 = vmatprep.subr.bf16.mxu0 %v410
    %474 = vmatpush1.bf16.msra.mxu0 %v409
    %475 = vmatprep.subr.bf16.mxu0 %v412
    %476 = vmatpush1.bf16.msra.mxu0 %v411
    %477 = vmatprep.subr.bf16.mxu0 %v414
    %478 = vmatpush1.bf16.msra.mxu0 %v413
    %479 = vmatprep.subr.bf16.mxu0 %v416
    %480 = vmatpush1.bf16.msra.mxu0 %v415
    %481 = vmatprep.subr.bf16.mxu0 %v418
    %482 = vmatpush1.bf16.msra.mxu0 %v417
    %483 = vmatprep.mubr.bf16.mxu0 %v240
    %484 = vmatmul.mubr.bf16.gmra.mrb[0].mxu0 %v239
    %v485 = vpop.f32.mrb[0].mxu0
    %v486 = vadd.f32 %v284, %v485
    %v487 = vpop.f32.mrb[0].mxu0
    %v488 = vadd.f32 %v288, %v487
    %v489 = vpop.f32.mrb[0].mxu0
    %v490 = vadd.f32 %v284, %v489
    %v491 = vpop.f32.mrb[0].mxu0
    %v492 = vadd.f32 %v288, %v491
    %493 = vmatprep.mubr.bf16.mxu0 %v242
    %494 = vmatmul.mubr.bf16.gmra.mrb[0].mxu0 %v241
    %v495 = vpop.f32.mrb[0].mxu0
    %v496 = vadd.f32 %v284, %v495
    %v497 = vpop.f32.mrb[0].mxu0
    %v498 = vadd.f32 %v288, %v497
    %v499 = vpop.f32.mrb[0].mxu0
    %v500 = vadd.f32 %v284, %v499
    %v501 = vpop.f32.mrb[0].mxu0
    %v502 = vadd.f32 %v288, %v501
    %503 = vmatprep.mubr.bf16.mxu0 %v244
    %504 = vmatmul.mubr.bf16.gmra.mrb[0].mxu0 %v243
    %v505 = vpop.f32.mrb[0].mxu0
    %v506 = vadd.f32 %v284, %v505
    %v507 = vpop.f32.mrb[0].mxu0
    %v508 = vadd.f32 %v288, %v507
    %v509 = vpop.f32.mrb[0].mxu0
    %v510 = vadd.f32 %v284, %v509
    %v511 = vpop.f32.mrb[0].mxu0
    %v512 = vadd.f32 %v288, %v511
    %513 = vmatprep.mubr.bf16.mxu0 %v246
    %514 = vmatmul.mubr.bf16.gmra.mrb[0].mxu0 %v245
    %v515 = vpop.f32.mrb[0].mxu0
    %v516 = vadd.f32 %v284, %v515
    %v517 = vpop.f32.mrb[0].mxu0
    %v518 = vadd.f32 %v288, %v517
    %v519 = vpop.f32.mrb[0].mxu0
    %v520 = vadd.f32 %v284, %v519
    %v521 = vpop.f32.mrb[0].mxu0
    %v522 = vadd.f32 %v288, %v521
    %523 = vdwg.mxu0
    %v524 = vpack.c.bf16 %v490, %v486
    %v525 = vpack.c.bf16 %v492, %v488
    %v526 = vpack.c.bf16 %v500, %v496
    %v527 = vpack.c.bf16 %v502, %v498
    %v528 = vpack.c.bf16 %v510, %v506
    %v529 = vpack.c.bf16 %v512, %v508
    %v530 = vpack.c.bf16 %v520, %v516
    %v531 = vpack.c.bf16 %v522, %v518
    %v532 = vtanh.bf16.pop %v524
    %v533 = vtanh.bf16.pop %v525
    %v534 = vtanh.bf16.pop %v526
    %v535 = vtanh.bf16.pop %v527
    %v536 = vtanh.bf16.pop %v528
    %v537 = vtanh.bf16.pop %v529
    %v538 = vtanh.bf16.pop %v530
    %v539 = vtanh.bf16.pop %v531
    %s540 = scalar_lea.vmem [#allocation3], 256
    %v541 = vld [vmem:[%s540] sm:$0xff]
    %v542 = vld [vmem:[%s540 + $0x8] sm:$0xff]
    %v543 = vld [vmem:[%s540 + $0x10] sm:$0xff]
    %v544 = vld [vmem:[%s540 + $0x18] sm:$0xff]
    %v545 = vld [vmem:[%s540 + $0x20] sm:$0xff]
    %v546 = vld [vmem:[%s540 + $0x28] sm:$0xff]
    %v547 = vld [vmem:[%s540 + $0x30] sm:$0xff]
    %v548 = vld [vmem:[%s540 + $0x38] sm:$0xff]
    %v549 = vld [vmem:[%s540 + $0x40] sm:$0xff]
    %v550 = vld [vmem:[%s540 + $0x48] sm:$0xff]
    %v551 = vld [vmem:[%s540 + $0x50] sm:$0xff]
    %v552 = vld [vmem:[%s540 + $0x58] sm:$0xff]
    %v553 = vld [vmem:[%s540 + $0x60] sm:$0xff]
    %v554 = vld [vmem:[%s540 + $0x68] sm:$0xff]
    %v555 = vld [vmem:[%s540 + $0x70] sm:$0xff]
    %v556 = vld [vmem:[%s540 + $0x78] sm:$0xff]
    %v557 = vld [vmem:[%s540 + $0x80] sm:$0xff]
    %v558 = vld [vmem:[%s540 + $0x88] sm:$0xff]
    %v559 = vld [vmem:[%s540 + $0x90] sm:$0xff]
    %v560 = vld [vmem:[%s540 + $0x98] sm:$0xff]
    %v561 = vld [vmem:[%s540 + $0xa0] sm:$0xff]
    %v562 = vld [vmem:[%s540 + $0xa8] sm:$0xff]
    %v563 = vld [vmem:[%s540 + $0xb0] sm:$0xff]
    %v564 = vld [vmem:[%s540 + $0xb8] sm:$0xff]
    %v565 = vld [vmem:[%s540 + $0xc0] sm:$0xff]
    %v566 = vld [vmem:[%s540 + $0xc8] sm:$0xff]
    %v567 = vld [vmem:[%s540 + $0xd0] sm:$0xff]
    %v568 = vld [vmem:[%s540 + $0xd8] sm:$0xff]
    %v569 = vld [vmem:[%s540 + $0xe0] sm:$0xff]
    %v570 = vld [vmem:[%s540 + $0xe8] sm:$0xff]
    %v571 = vld [vmem:[%s540 + $0xf0] sm:$0xff]
    %v572 = vld [vmem:[%s540 + $0xf8] sm:$0xff]
    %s573 = scalar_lea.vmem %s4, 2
    %v574 = vld [vmem:[%s573] sm:$0x3]
    %v576 = vlaneseq
    %v577 = vshrl.u32 %v576, 7
    %v578 = vsub.s32 0, %v577
    %v579 = vrot.slane %v574, %v578
    %v580 = vlaneseq
    %v581 = vshrl.u32 %v580, 7
    %v582 = vsub.s32 1, %v581
    %v583 = vrot.slane %v574, %v582
    %v618 = vunpack.c.l.b16 %v541
    %v619 = vunpack.c.h.b16 %v541
    %v620 = vunpack.c.l.b16 %v542
    %v621 = vunpack.c.h.b16 %v542
    %v622 = vunpack.c.l.b16 %v543
    %v623 = vunpack.c.h.b16 %v543
    %v624 = vunpack.c.l.b16 %v544
    %v625 = vunpack.c.h.b16 %v544
    %v626 = vunpack.c.l.b16 %v545
    %v627 = vunpack.c.h.b16 %v545
    %v628 = vunpack.c.l.b16 %v546
    %v629 = vunpack.c.h.b16 %v546
    %v630 = vunpack.c.l.b16 %v547
    %v631 = vunpack.c.h.b16 %v547
    %v632 = vunpack.c.l.b16 %v548
    %v633 = vunpack.c.h.b16 %v548
    %v634 = vunpack.c.l.b16 %v549
    %v635 = vunpack.c.h.b16 %v549
    %v636 = vunpack.c.l.b16 %v550
    %v637 = vunpack.c.h.b16 %v550
    %v638 = vunpack.c.l.b16 %v551
    %v639 = vunpack.c.h.b16 %v551
    %v640 = vunpack.c.l.b16 %v552
    %v641 = vunpack.c.h.b16 %v552
    %v642 = vunpack.c.l.b16 %v553
    %v643 = vunpack.c.h.b16 %v553
    %v644 = vunpack.c.l.b16 %v554
    %v645 = vunpack.c.h.b16 %v554
    %v646 = vunpack.c.l.b16 %v555
    %v647 = vunpack.c.h.b16 %v555
    %v648 = vunpack.c.l.b16 %v556
    %v649 = vunpack.c.h.b16 %v556
    %v650 = vunpack.c.l.b16 %v557
    %v651 = vunpack.c.h.b16 %v557
    %v652 = vunpack.c.l.b16 %v558
    %v653 = vunpack.c.h.b16 %v558
    %v654 = vunpack.c.l.b16 %v559
    %v655 = vunpack.c.h.b16 %v559
    %v656 = vunpack.c.l.b16 %v560
    %v657 = vunpack.c.h.b16 %v560
    %v658 = vunpack.c.l.b16 %v561
    %v659 = vunpack.c.h.b16 %v561
    %v660 = vunpack.c.l.b16 %v562
    %v661 = vunpack.c.h.b16 %v562
    %v662 = vunpack.c.l.b16 %v563
    %v663 = vunpack.c.h.b16 %v563
    %v664 = vunpack.c.l.b16 %v564
    %v665 = vunpack.c.h.b16 %v564
    %v666 = vunpack.c.l.b16 %v565
    %v667 = vunpack.c.h.b16 %v565
    %v668 = vunpack.c.l.b16 %v566
    %v669 = vunpack.c.h.b16 %v566
    %v670 = vunpack.c.l.b16 %v567
    %v671 = vunpack.c.h.b16 %v567
    %v672 = vunpack.c.l.b16 %v568
    %v673 = vunpack.c.h.b16 %v568
    %v674 = vunpack.c.l.b16 %v569
    %v675 = vunpack.c.h.b16 %v569
    %v676 = vunpack.c.l.b16 %v570
    %v677 = vunpack.c.h.b16 %v570
    %v678 = vunpack.c.l.b16 %v571
    %v679 = vunpack.c.h.b16 %v571
    %v680 = vunpack.c.l.b16 %v572
    %v681 = vunpack.c.h.b16 %v572
    %v682 = vpack.c.b16 %v620, %v618
    %v683 = vpack.c.b16 %v621, %v619
    %v684 = vpack.c.b16 %v624, %v622
    %v685 = vpack.c.b16 %v625, %v623
    %v686 = vpack.c.b16 %v628, %v626
    %v687 = vpack.c.b16 %v629, %v627
    %v688 = vpack.c.b16 %v632, %v630
    %v689 = vpack.c.b16 %v633, %v631
    %v690 = vpack.c.b16 %v636, %v634
    %v691 = vpack.c.b16 %v637, %v635
    %v692 = vpack.c.b16 %v640, %v638
    %v693 = vpack.c.b16 %v641, %v639
    %v694 = vpack.c.b16 %v644, %v642
    %v695 = vpack.c.b16 %v645, %v643
    %v696 = vpack.c.b16 %v648, %v646
    %v697 = vpack.c.b16 %v649, %v647
    %v698 = vpack.c.b16 %v652, %v650
    %v699 = vpack.c.b16 %v653, %v651
    %v700 = vpack.c.b16 %v656, %v654
    %v701 = vpack.c.b16 %v657, %v655
    %v702 = vpack.c.b16 %v660, %v658
    %v703 = vpack.c.b16 %v661, %v659
    %v704 = vpack.c.b16 %v664, %v662
    %v705 = vpack.c.b16 %v665, %v663
    %v706 = vpack.c.b16 %v668, %v666
    %v707 = vpack.c.b16 %v669, %v667
    %v708 = vpack.c.b16 %v672, %v670
    %v709 = vpack.c.b16 %v673, %v671
    %v710 = vpack.c.b16 %v676, %v674
    %v711 = vpack.c.b16 %v677, %v675
    %v712 = vpack.c.b16 %v680, %v678
    %v713 = vpack.c.b16 %v681, %v679
    %746 = vmatprep.subr.bf16.mxu0 %v683
    %747 = vmatpush1.bf16.msra.mxu0 %v682
    %748 = vmatprep.subr.bf16.mxu0 %v685
    %749 = vmatpush1.bf16.msra.mxu0 %v684
    %750 = vmatprep.subr.bf16.mxu0 %v687
    %751 = vmatpush1.bf16.msra.mxu0 %v686
    %752 = vmatprep.subr.bf16.mxu0 %v689
    %753 = vmatpush1.bf16.msra.mxu0 %v688
    %754 = vmatprep.subr.bf16.mxu0 %v691
    %755 = vmatpush1.bf16.msra.mxu0 %v690
    %756 = vmatprep.subr.bf16.mxu0 %v693
    %757 = vmatpush1.bf16.msra.mxu0 %v692
    %758 = vmatprep.subr.bf16.mxu0 %v695
    %759 = vmatpush1.bf16.msra.mxu0 %v694
    %760 = vmatprep.subr.bf16.mxu0 %v697
    %761 = vmatpush1.bf16.msra.mxu0 %v696
    %762 = vmatprep.subr.bf16.mxu0 %v699
    %763 = vmatpush1.bf16.msra.mxu0 %v698
    %764 = vmatprep.subr.bf16.mxu0 %v701
    %765 = vmatpush1.bf16.msra.mxu0 %v700
    %766 = vmatprep.subr.bf16.mxu0 %v703
    %767 = vmatpush1.bf16.msra.mxu0 %v702
    %768 = vmatprep.subr.bf16.mxu0 %v705
    %769 = vmatpush1.bf16.msra.mxu0 %v704
    %770 = vmatprep.subr.bf16.mxu0 %v707
    %771 = vmatpush1.bf16.msra.mxu0 %v706
    %772 = vmatprep.subr.bf16.mxu0 %v709
    %773 = vmatpush1.bf16.msra.mxu0 %v708
    %774 = vmatprep.subr.bf16.mxu0 %v711
    %775 = vmatpush1.bf16.msra.mxu0 %v710
    %776 = vmatprep.subr.bf16.mxu0 %v713
    %777 = vmatpush1.bf16.msra.mxu0 %v712
    %778 = vmatprep.mubr.bf16.mxu0 %v533
    %779 = vmatmul.mubr.bf16.gmra.mrb[0].mxu0 %v532
    %v780 = vpop.f32.mrb[0].mxu0
    %v781 = vadd.f32 %v579, %v780
    %v782 = vpop.f32.mrb[0].mxu0
    %v783 = vadd.f32 %v583, %v782
    %v784 = vpop.f32.mrb[0].mxu0
    %v785 = vadd.f32 %v579, %v784
    %v786 = vpop.f32.mrb[0].mxu0
    %v787 = vadd.f32 %v583, %v786
    %788 = vmatprep.mubr.bf16.mxu0 %v535
    %789 = vmatmul.mubr.bf16.gmra.mrb[0].mxu0 %v534
    %v790 = vpop.f32.mrb[0].mxu0
    %v791 = vadd.f32 %v579, %v790
    %v792 = vpop.f32.mrb[0].mxu0
    %v793 = vadd.f32 %v583, %v792
    %v794 = vpop.f32.mrb[0].mxu0
    %v795 = vadd.f32 %v579, %v794
    %v796 = vpop.f32.mrb[0].mxu0
    %v797 = vadd.f32 %v583, %v796
    %798 = vmatprep.mubr.bf16.mxu0 %v537
    %799 = vmatmul.mubr.bf16.gmra.mrb[0].mxu0 %v536
    %v800 = vpop.f32.mrb[0].mxu0
    %v801 = vadd.f32 %v579, %v800
    %v802 = vpop.f32.mrb[0].mxu0
    %v803 = vadd.f32 %v583, %v802
    %v804 = vpop.f32.mrb[0].mxu0
    %v805 = vadd.f32 %v579, %v804
    %v806 = vpop.f32.mrb[0].mxu0
    %v807 = vadd.f32 %v583, %v806
    %808 = vmatprep.mubr.bf16.mxu0 %v539
    %809 = vmatmul.mubr.bf16.gmra.mrb[0].mxu0 %v538
    %v810 = vpop.f32.mrb[0].mxu0
    %v811 = vadd.f32 %v579, %v810
    %v812 = vpop.f32.mrb[0].mxu0
    %v813 = vadd.f32 %v583, %v812
    %v814 = vpop.f32.mrb[0].mxu0
    %v815 = vadd.f32 %v579, %v814
    %v816 = vpop.f32.mrb[0].mxu0
    %v817 = vadd.f32 %v583, %v816
    %818 = vdwg.mxu0
    %v819 = vpack.c.bf16 %v785, %v781
    %v820 = vpack.c.bf16 %v787, %v783
    %v821 = vpack.c.bf16 %v795, %v791
    %v822 = vpack.c.bf16 %v797, %v793
    %v823 = vpack.c.bf16 %v805, %v801
    %v824 = vpack.c.bf16 %v807, %v803
    %v825 = vpack.c.bf16 %v815, %v811
    %v826 = vpack.c.bf16 %v817, %v813
    %v827 = vtanh.bf16.pop %v819
    %v828 = vtanh.bf16.pop %v820
    %v829 = vtanh.bf16.pop %v821
    %v830 = vtanh.bf16.pop %v822
    %v831 = vtanh.bf16.pop %v823
    %v832 = vtanh.bf16.pop %v824
    %v833 = vtanh.bf16.pop %v825
    %v834 = vtanh.bf16.pop %v826
    %s835 = scalar_lea.vmem [#allocation3], 512
    %v836 = vld [vmem:[%s835] sm:$0xff]
    %v837 = vld [vmem:[%s835 + $0x8] sm:$0xff]
    %v838 = vld [vmem:[%s835 + $0x10] sm:$0xff]
    %v839 = vld [vmem:[%s835 + $0x18] sm:$0xff]
    %v840 = vld [vmem:[%s835 + $0x20] sm:$0xff]
    %v841 = vld [vmem:[%s835 + $0x28] sm:$0xff]
    %v842 = vld [vmem:[%s835 + $0x30] sm:$0xff]
    %v843 = vld [vmem:[%s835 + $0x38] sm:$0xff]
    %v844 = vld [vmem:[%s835 + $0x40] sm:$0xff]
    %v845 = vld [vmem:[%s835 + $0x48] sm:$0xff]
    %v846 = vld [vmem:[%s835 + $0x50] sm:$0xff]
    %v847 = vld [vmem:[%s835 + $0x58] sm:$0xff]
    %v848 = vld [vmem:[%s835 + $0x60] sm:$0xff]
    %v849 = vld [vmem:[%s835 + $0x68] sm:$0xff]
    %v850 = vld [vmem:[%s835 + $0x70] sm:$0xff]
    %v851 = vld [vmem:[%s835 + $0x78] sm:$0xff]
    %v852 = vld [vmem:[%s835 + $0x80] sm:$0xff]
    %v853 = vld [vmem:[%s835 + $0x88] sm:$0xff]
    %v854 = vld [vmem:[%s835 + $0x90] sm:$0xff]
    %v855 = vld [vmem:[%s835 + $0x98] sm:$0xff]
    %v856 = vld [vmem:[%s835 + $0xa0] sm:$0xff]
    %v857 = vld [vmem:[%s835 + $0xa8] sm:$0xff]
    %v858 = vld [vmem:[%s835 + $0xb0] sm:$0xff]
    %v859 = vld [vmem:[%s835 + $0xb8] sm:$0xff]
    %v860 = vld [vmem:[%s835 + $0xc0] sm:$0xff]
    %v861 = vld [vmem:[%s835 + $0xc8] sm:$0xff]
    %v862 = vld [vmem:[%s835 + $0xd0] sm:$0xff]
    %v863 = vld [vmem:[%s835 + $0xd8] sm:$0xff]
    %v864 = vld [vmem:[%s835 + $0xe0] sm:$0xff]
    %v865 = vld [vmem:[%s835 + $0xe8] sm:$0xff]
    %v866 = vld [vmem:[%s835 + $0xf0] sm:$0xff]
    %v867 = vld [vmem:[%s835 + $0xf8] sm:$0xff]
    %s868 = scalar_lea.vmem %s4, 4
    %v869 = vld [vmem:[%s868] sm:$0x3]
    %v871 = vlaneseq
    %v872 = vshrl.u32 %v871, 7
    %v873 = vsub.s32 0, %v872
    %v874 = vrot.slane %v869, %v873
    %v875 = vlaneseq
    %v876 = vshrl.u32 %v875, 7
    %v877 = vsub.s32 1, %v876
    %v878 = vrot.slane %v869, %v877
    %v913 = vunpack.c.l.b16 %v836
    %v914 = vunpack.c.h.b16 %v836
    %v915 = vunpack.c.l.b16 %v837
    %v916 = vunpack.c.h.b16 %v837
    %v917 = vunpack.c.l.b16 %v838
    %v918 = vunpack.c.h.b16 %v838
    %v919 = vunpack.c.l.b16 %v839
    %v920 = vunpack.c.h.b16 %v839
    %v921 = vunpack.c.l.b16 %v840
    %v922 = vunpack.c.h.b16 %v840
    %v923 = vunpack.c.l.b16 %v841
    %v924 = vunpack.c.h.b16 %v841
    %v925 = vunpack.c.l.b16 %v842
    %v926 = vunpack.c.h.b16 %v842
    %v927 = vunpack.c.l.b16 %v843
    %v928 = vunpack.c.h.b16 %v843
    %v929 = vunpack.c.l.b16 %v844
    %v930 = vunpack.c.h.b16 %v844
    %v931 = vunpack.c.l.b16 %v845
    %v932 = vunpack.c.h.b16 %v845
    %v933 = vunpack.c.l.b16 %v846
    %v934 = vunpack.c.h.b16 %v846
    %v935 = vunpack.c.l.b16 %v847
    %v936 = vunpack.c.h.b16 %v847
    %v937 = vunpack.c.l.b16 %v848
    %v938 = vunpack.c.h.b16 %v848
    %v939 = vunpack.c.l.b16 %v849
    %v940 = vunpack.c.h.b16 %v849
    %v941 = vunpack.c.l.b16 %v850
    %v942 = vunpack.c.h.b16 %v850
    %v943 = vunpack.c.l.b16 %v851
    %v944 = vunpack.c.h.b16 %v851
    %v945 = vunpack.c.l.b16 %v852
    %v946 = vunpack.c.h.b16 %v852
    %v947 = vunpack.c.l.b16 %v853
    %v948 = vunpack.c.h.b16 %v853
    %v949 = vunpack.c.l.b16 %v854
    %v950 = vunpack.c.h.b16 %v854
    %v951 = vunpack.c.l.b16 %v855
    %v952 = vunpack.c.h.b16 %v855
    %v953 = vunpack.c.l.b16 %v856
    %v954 = vunpack.c.h.b16 %v856
    %v955 = vunpack.c.l.b16 %v857
    %v956 = vunpack.c.h.b16 %v857
    %v957 = vunpack.c.l.b16 %v858
    %v958 = vunpack.c.h.b16 %v858
    %v959 = vunpack.c.l.b16 %v859
    %v960 = vunpack.c.h.b16 %v859
    %v961 = vunpack.c.l.b16 %v860
    %v962 = vunpack.c.h.b16 %v860
    %v963 = vunpack.c.l.b16 %v861
    %v964 = vunpack.c.h.b16 %v861
    %v965 = vunpack.c.l.b16 %v862
    %v966 = vunpack.c.h.b16 %v862
    %v967 = vunpack.c.l.b16 %v863
    %v968 = vunpack.c.h.b16 %v863
    %v969 = vunpack.c.l.b16 %v864
    %v970 = vunpack.c.h.b16 %v864
    %v971 = vunpack.c.l.b16 %v865
    %v972 = vunpack.c.h.b16 %v865
    %v973 = vunpack.c.l.b16 %v866
    %v974 = vunpack.c.h.b16 %v866
    %v975 = vunpack.c.l.b16 %v867
    %v976 = vunpack.c.h.b16 %v867
    %v977 = vpack.c.b16 %v915, %v913
    %v978 = vpack.c.b16 %v916, %v914
    %v979 = vpack.c.b16 %v919, %v917
    %v980 = vpack.c.b16 %v920, %v918
    %v981 = vpack.c.b16 %v923, %v921
    %v982 = vpack.c.b16 %v924, %v922
    %v983 = vpack.c.b16 %v927, %v925
    %v984 = vpack.c.b16 %v928, %v926
    %v985 = vpack.c.b16 %v931, %v929
    %v986 = vpack.c.b16 %v932, %v930
    %v987 = vpack.c.b16 %v935, %v933
    %v988 = vpack.c.b16 %v936, %v934
    %v989 = vpack.c.b16 %v939, %v937
    %v990 = vpack.c.b16 %v940, %v938
    %v991 = vpack.c.b16 %v943, %v941
    %v992 = vpack.c.b16 %v944, %v942
    %v993 = vpack.c.b16 %v947, %v945
    %v994 = vpack.c.b16 %v948, %v946
    %v995 = vpack.c.b16 %v951, %v949
    %v996 = vpack.c.b16 %v952, %v950
    %v997 = vpack.c.b16 %v955, %v953
    %v998 = vpack.c.b16 %v956, %v954
    %v999 = vpack.c.b16 %v959, %v957
    %v1000 = vpack.c.b16 %v960, %v958
    %v1001 = vpack.c.b16 %v963, %v961
    %v1002 = vpack.c.b16 %v964, %v962
    %v1003 = vpack.c.b16 %v967, %v965
    %v1004 = vpack.c.b16 %v968, %v966
    %v1005 = vpack.c.b16 %v971, %v969
    %v1006 = vpack.c.b16 %v972, %v970
    %v1007 = vpack.c.b16 %v975, %v973
    %v1008 = vpack.c.b16 %v976, %v974
    %1041 = vmatprep.subr.bf16.mxu0 %v978
    %1042 = vmatpush1.bf16.msra.mxu0 %v977
    %1043 = vmatprep.subr.bf16.mxu0 %v980
    %1044 = vmatpush1.bf16.msra.mxu0 %v979
    %1045 = vmatprep.subr.bf16.mxu0 %v982
    %1046 = vmatpush1.bf16.msra.mxu0 %v981
    %1047 = vmatprep.subr.bf16.mxu0 %v984
    %1048 = vmatpush1.bf16.msra.mxu0 %v983
    %1049 = vmatprep.subr.bf16.mxu0 %v986
    %1050 = vmatpush1.bf16.msra.mxu0 %v985
    %1051 = vmatprep.subr.bf16.mxu0 %v988
    %1052 = vmatpush1.bf16.msra.mxu0 %v987
    %1053 = vmatprep.subr.bf16.mxu0 %v990
    %1054 = vmatpush1.bf16.msra.mxu0 %v989
    %1055 = vmatprep.subr.bf16.mxu0 %v992
    %1056 = vmatpush1.bf16.msra.mxu0 %v991
    %1057 = vmatprep.subr.bf16.mxu0 %v994
    %1058 = vmatpush1.bf16.msra.mxu0 %v993
    %1059 = vmatprep.subr.bf16.mxu0 %v996
    %1060 = vmatpush1.bf16.msra.mxu0 %v995
    %1061 = vmatprep.subr.bf16.mxu0 %v998
    %1062 = vmatpush1.bf16.msra.mxu0 %v997
    %1063 = vmatprep.subr.bf16.mxu0 %v1000
    %1064 = vmatpush1.bf16.msra.mxu0 %v999
    %1065 = vmatprep.subr.bf16.mxu0 %v1002
    %1066 = vmatpush1.bf16.msra.mxu0 %v1001
    %1067 = vmatprep.subr.bf16.mxu0 %v1004
    %1068 = vmatpush1.bf16.msra.mxu0 %v1003
    %1069 = vmatprep.subr.bf16.mxu0 %v1006
    %1070 = vmatpush1.bf16.msra.mxu0 %v1005
    %1071 = vmatprep.subr.bf16.mxu0 %v1008
    %1072 = vmatpush1.bf16.msra.mxu0 %v1007
    %1073 = vmatprep.mubr.bf16.mxu0 %v828
    %1074 = vmatmul.mubr.bf16.gmra.mrb[0].mxu0 %v827
    %v1075 = vpop.f32.mrb[0].mxu0
    %v1076 = vadd.f32 %v874, %v1075
    %v1077 = vpop.f32.mrb[0].mxu0
    %v1078 = vadd.f32 %v878, %v1077
    %v1079 = vpop.f32.mrb[0].mxu0
    %v1080 = vadd.f32 %v874, %v1079
    %v1081 = vpop.f32.mrb[0].mxu0
    %v1082 = vadd.f32 %v878, %v1081
    %1083 = vmatprep.mubr.bf16.mxu0 %v830
    %1084 = vmatmul.mubr.bf16.gmra.mrb[0].mxu0 %v829
    %v1085 = vpop.f32.mrb[0].mxu0
    %v1086 = vadd.f32 %v874, %v1085
    %v1087 = vpop.f32.mrb[0].mxu0
    %v1088 = vadd.f32 %v878, %v1087
    %v1089 = vpop.f32.mrb[0].mxu0
    %v1090 = vadd.f32 %v874, %v1089
    %v1091 = vpop.f32.mrb[0].mxu0
    %v1092 = vadd.f32 %v878, %v1091
    %1093 = vmatprep.mubr.bf16.mxu0 %v832
    %1094 = vmatmul.mubr.bf16.gmra.mrb[0].mxu0 %v831
    %v1095 = vpop.f32.mrb[0].mxu0
    %v1096 = vadd.f32 %v874, %v1095
    %v1097 = vpop.f32.mrb[0].mxu0
    %v1098 = vadd.f32 %v878, %v1097
    %v1099 = vpop.f32.mrb[0].mxu0
    %v1100 = vadd.f32 %v874, %v1099
    %v1101 = vpop.f32.mrb[0].mxu0
    %v1102 = vadd.f32 %v878, %v1101
    %1103 = vmatprep.mubr.bf16.mxu0 %v834
    %1104 = vmatmul.mubr.bf16.gmra.mrb[0].mxu0 %v833
    %v1105 = vpop.f32.mrb[0].mxu0
    %v1106 = vadd.f32 %v874, %v1105
    %v1107 = vpop.f32.mrb[0].mxu0
    %v1108 = vadd.f32 %v878, %v1107
    %v1109 = vpop.f32.mrb[0].mxu0
    %v1110 = vadd.f32 %v874, %v1109
    %v1111 = vpop.f32.mrb[0].mxu0
    %v1112 = vadd.f32 %v878, %v1111
    %1113 = vdwg.mxu0
    %v1114 = vpack.c.bf16 %v1080, %v1076
    %v1115 = vpack.c.bf16 %v1082, %v1078
    %v1116 = vpack.c.bf16 %v1090, %v1086
    %v1117 = vpack.c.bf16 %v1092, %v1088
    %v1118 = vpack.c.bf16 %v1100, %v1096
    %v1119 = vpack.c.bf16 %v1102, %v1098
    %v1120 = vpack.c.bf16 %v1110, %v1106
    %v1121 = vpack.c.bf16 %v1112, %v1108
    %v1122 = vtanh.bf16.pop %v1114
    %v1123 = vtanh.bf16.pop %v1115
    %v1124 = vtanh.bf16.pop %v1116
    %v1125 = vtanh.bf16.pop %v1117
    %v1126 = vtanh.bf16.pop %v1118
    %v1127 = vtanh.bf16.pop %v1119
    %v1128 = vtanh.bf16.pop %v1120
    %v1129 = vtanh.bf16.pop %v1121
    %s1130 = scalar_lea.vmem [#allocation3], 768
    %v1131 = vld [vmem:[%s1130] sm:$0xff]
    %v1132 = vld [vmem:[%s1130 + $0x8] sm:$0xff]
    %v1133 = vld [vmem:[%s1130 + $0x10] sm:$0xff]
    %v1134 = vld [vmem:[%s1130 + $0x18] sm:$0xff]
    %v1135 = vld [vmem:[%s1130 + $0x20] sm:$0xff]
    %v1136 = vld [vmem:[%s1130 + $0x28] sm:$0xff]
    %v1137 = vld [vmem:[%s1130 + $0x30] sm:$0xff]
    %v1138 = vld [vmem:[%s1130 + $0x38] sm:$0xff]
    %v1139 = vld [vmem:[%s1130 + $0x40] sm:$0xff]
    %v1140 = vld [vmem:[%s1130 + $0x48] sm:$0xff]
    %v1141 = vld [vmem:[%s1130 + $0x50] sm:$0xff]
    %v1142 = vld [vmem:[%s1130 + $0x58] sm:$0xff]
    %v1143 = vld [vmem:[%s1130 + $0x60] sm:$0xff]
    %v1144 = vld [vmem:[%s1130 + $0x68] sm:$0xff]
    %v1145 = vld [vmem:[%s1130 + $0x70] sm:$0xff]
    %v1146 = vld [vmem:[%s1130 + $0x78] sm:$0xff]
    %v1147 = vld [vmem:[%s1130 + $0x80] sm:$0xff]
    %v1148 = vld [vmem:[%s1130 + $0x88] sm:$0xff]
    %v1149 = vld [vmem:[%s1130 + $0x90] sm:$0xff]
    %v1150 = vld [vmem:[%s1130 + $0x98] sm:$0xff]
    %v1151 = vld [vmem:[%s1130 + $0xa0] sm:$0xff]
    %v1152 = vld [vmem:[%s1130 + $0xa8] sm:$0xff]
    %v1153 = vld [vmem:[%s1130 + $0xb0] sm:$0xff]
    %v1154 = vld [vmem:[%s1130 + $0xb8] sm:$0xff]
    %v1155 = vld [vmem:[%s1130 + $0xc0] sm:$0xff]
    %v1156 = vld [vmem:[%s1130 + $0xc8] sm:$0xff]
    %v1157 = vld [vmem:[%s1130 + $0xd0] sm:$0xff]
    %v1158 = vld [vmem:[%s1130 + $0xd8] sm:$0xff]
    %v1159 = vld [vmem:[%s1130 + $0xe0] sm:$0xff]
    %v1160 = vld [vmem:[%s1130 + $0xe8] sm:$0xff]
    %v1161 = vld [vmem:[%s1130 + $0xf0] sm:$0xff]
    %v1162 = vld [vmem:[%s1130 + $0xf8] sm:$0xff]
    %s1163 = scalar_lea.vmem %s4, 6
    %v1164 = vld [vmem:[%s1163] sm:$0x3]
    %v1166 = vlaneseq
    %v1167 = vshrl.u32 %v1166, 7
    %v1168 = vsub.s32 0, %v1167
    %v1169 = vrot.slane %v1164, %v1168
    %v1170 = vlaneseq
    %v1171 = vshrl.u32 %v1170, 7
    %v1172 = vsub.s32 1, %v1171
    %v1173 = vrot.slane %v1164, %v1172
    %v1208 = vunpack.c.l.b16 %v1131
    %v1209 = vunpack.c.h.b16 %v1131
    %v1210 = vunpack.c.l.b16 %v1132
    %v1211 = vunpack.c.h.b16 %v1132
    %v1212 = vunpack.c.l.b16 %v1133
    %v1213 = vunpack.c.h.b16 %v1133
    %v1214 = vunpack.c.l.b16 %v1134
    %v1215 = vunpack.c.h.b16 %v1134
    %v1216 = vunpack.c.l.b16 %v1135
    %v1217 = vunpack.c.h.b16 %v1135
    %v1218 = vunpack.c.l.b16 %v1136
    %v1219 = vunpack.c.h.b16 %v1136
    %v1220 = vunpack.c.l.b16 %v1137
    %v1221 = vunpack.c.h.b16 %v1137
    %v1222 = vunpack.c.l.b16 %v1138
    %v1223 = vunpack.c.h.b16 %v1138
    %v1224 = vunpack.c.l.b16 %v1139
    %v1225 = vunpack.c.h.b16 %v1139
    %v1226 = vunpack.c.l.b16 %v1140
    %v1227 = vunpack.c.h.b16 %v1140
    %v1228 = vunpack.c.l.b16 %v1141
    %v1229 = vunpack.c.h.b16 %v1141
    %v1230 = vunpack.c.l.b16 %v1142
    %v1231 = vunpack.c.h.b16 %v1142
    %v1232 = vunpack.c.l.b16 %v1143
    %v1233 = vunpack.c.h.b16 %v1143
    %v1234 = vunpack.c.l.b16 %v1144
    %v1235 = vunpack.c.h.b16 %v1144
    %v1236 = vunpack.c.l.b16 %v1145
    %v1237 = vunpack.c.h.b16 %v1145
    %v1238 = vunpack.c.l.b16 %v1146
    %v1239 = vunpack.c.h.b16 %v1146
    %v1240 = vunpack.c.l.b16 %v1147
    %v1241 = vunpack.c.h.b16 %v1147
    %v1242 = vunpack.c.l.b16 %v1148
    %v1243 = vunpack.c.h.b16 %v1148
    %v1244 = vunpack.c.l.b16 %v1149
    %v1245 = vunpack.c.h.b16 %v1149
    %v1246 = vunpack.c.l.b16 %v1150
    %v1247 = vunpack.c.h.b16 %v1150
    %v1248 = vunpack.c.l.b16 %v1151
    %v1249 = vunpack.c.h.b16 %v1151
    %v1250 = vunpack.c.l.b16 %v1152
    %v1251 = vunpack.c.h.b16 %v1152
    %v1252 = vunpack.c.l.b16 %v1153
    %v1253 = vunpack.c.h.b16 %v1153
    %v1254 = vunpack.c.l.b16 %v1154
    %v1255 = vunpack.c.h.b16 %v1154
    %v1256 = vunpack.c.l.b16 %v1155
    %v1257 = vunpack.c.h.b16 %v1155
    %v1258 = vunpack.c.l.b16 %v1156
    %v1259 = vunpack.c.h.b16 %v1156
    %v1260 = vunpack.c.l.b16 %v1157
    %v1261 = vunpack.c.h.b16 %v1157
    %v1262 = vunpack.c.l.b16 %v1158
    %v1263 = vunpack.c.h.b16 %v1158
    %v1264 = vunpack.c.l.b16 %v1159
    %v1265 = vunpack.c.h.b16 %v1159
    %v1266 = vunpack.c.l.b16 %v1160
    %v1267 = vunpack.c.h.b16 %v1160
    %v1268 = vunpack.c.l.b16 %v1161
    %v1269 = vunpack.c.h.b16 %v1161
    %v1270 = vunpack.c.l.b16 %v1162
    %v1271 = vunpack.c.h.b16 %v1162
    %v1272 = vpack.c.b16 %v1210, %v1208
    %v1273 = vpack.c.b16 %v1211, %v1209
    %v1274 = vpack.c.b16 %v1214, %v1212
    %v1275 = vpack.c.b16 %v1215, %v1213
    %v1276 = vpack.c.b16 %v1218, %v1216
    %v1277 = vpack.c.b16 %v1219, %v1217
    %v1278 = vpack.c.b16 %v1222, %v1220
    %v1279 = vpack.c.b16 %v1223, %v1221
    %v1280 = vpack.c.b16 %v1226, %v1224
    %v1281 = vpack.c.b16 %v1227, %v1225
    %v1282 = vpack.c.b16 %v1230, %v1228
    %v1283 = vpack.c.b16 %v1231, %v1229
    %v1284 = vpack.c.b16 %v1234, %v1232
    %v1285 = vpack.c.b16 %v1235, %v1233
    %v1286 = vpack.c.b16 %v1238, %v1236
    %v1287 = vpack.c.b16 %v1239, %v1237
    %v1288 = vpack.c.b16 %v1242, %v1240
    %v1289 = vpack.c.b16 %v1243, %v1241
    %v1290 = vpack.c.b16 %v1246, %v1244
    %v1291 = vpack.c.b16 %v1247, %v1245
    %v1292 = vpack.c.b16 %v1250, %v1248
    %v1293 = vpack.c.b16 %v1251, %v1249
    %v1294 = vpack.c.b16 %v1254, %v1252
    %v1295 = vpack.c.b16 %v1255, %v1253
    %v1296 = vpack.c.b16 %v1258, %v1256
    %v1297 = vpack.c.b16 %v1259, %v1257
    %v1298 = vpack.c.b16 %v1262, %v1260
    %v1299 = vpack.c.b16 %v1263, %v1261
    %v1300 = vpack.c.b16 %v1266, %v1264
    %v1301 = vpack.c.b16 %v1267, %v1265
    %v1302 = vpack.c.b16 %v1270, %v1268
    %v1303 = vpack.c.b16 %v1271, %v1269
    %1336 = vmatprep.subr.bf16.mxu0 %v1273
    %1337 = vmatpush1.bf16.msra.mxu0 %v1272
    %1338 = vmatprep.subr.bf16.mxu0 %v1275
    %1339 = vmatpush1.bf16.msra.mxu0 %v1274
    %1340 = vmatprep.subr.bf16.mxu0 %v1277
    %1341 = vmatpush1.bf16.msra.mxu0 %v1276
    %1342 = vmatprep.subr.bf16.mxu0 %v1279
    %1343 = vmatpush1.bf16.msra.mxu0 %v1278
    %1344 = vmatprep.subr.bf16.mxu0 %v1281
    %1345 = vmatpush1.bf16.msra.mxu0 %v1280
    %1346 = vmatprep.subr.bf16.mxu0 %v1283
    %1347 = vmatpush1.bf16.msra.mxu0 %v1282
    %1348 = vmatprep.subr.bf16.mxu0 %v1285
    %1349 = vmatpush1.bf16.msra.mxu0 %v1284
    %1350 = vmatprep.subr.bf16.mxu0 %v1287
    %1351 = vmatpush1.bf16.msra.mxu0 %v1286
    %1352 = vmatprep.subr.bf16.mxu0 %v1289
    %1353 = vmatpush1.bf16.msra.mxu0 %v1288
    %1354 = vmatprep.subr.bf16.mxu0 %v1291
    %1355 = vmatpush1.bf16.msra.mxu0 %v1290
    %1356 = vmatprep.subr.bf16.mxu0 %v1293
    %1357 = vmatpush1.bf16.msra.mxu0 %v1292
    %1358 = vmatprep.subr.bf16.mxu0 %v1295
    %1359 = vmatpush1.bf16.msra.mxu0 %v1294
    %1360 = vmatprep.subr.bf16.mxu0 %v1297
    %1361 = vmatpush1.bf16.msra.mxu0 %v1296
    %1362 = vmatprep.subr.bf16.mxu0 %v1299
    %1363 = vmatpush1.bf16.msra.mxu0 %v1298
    %1364 = vmatprep.subr.bf16.mxu0 %v1301
    %1365 = vmatpush1.bf16.msra.mxu0 %v1300
    %1366 = vmatprep.subr.bf16.mxu0 %v1303
    %1367 = vmatpush1.bf16.msra.mxu0 %v1302
    %1368 = vmatprep.mubr.bf16.mxu0 %v1123
    %1369 = vmatmul.mubr.bf16.gmra.mrb[0].mxu0 %v1122
    %v1370 = vpop.f32.mrb[0].mxu0
    %v1371 = vadd.f32 %v1169, %v1370
    %v1372 = vpop.f32.mrb[0].mxu0
    %v1373 = vadd.f32 %v1173, %v1372
    %v1374 = vpop.f32.mrb[0].mxu0
    %v1375 = vadd.f32 %v1169, %v1374
    %v1376 = vpop.f32.mrb[0].mxu0
    %v1377 = vadd.f32 %v1173, %v1376
    %1378 = vmatprep.mubr.bf16.mxu0 %v1125
    %1379 = vmatmul.mubr.bf16.gmra.mrb[0].mxu0 %v1124
    %v1380 = vpop.f32.mrb[0].mxu0
    %v1381 = vadd.f32 %v1169, %v1380
    %v1382 = vpop.f32.mrb[0].mxu0
    %v1383 = vadd.f32 %v1173, %v1382
    %v1384 = vpop.f32.mrb[0].mxu0
    %v1385 = vadd.f32 %v1169, %v1384
    %v1386 = vpop.f32.mrb[0].mxu0
    %v1387 = vadd.f32 %v1173, %v1386
    %1388 = vmatprep.mubr.bf16.mxu0 %v1127
    %1389 = vmatmul.mubr.bf16.gmra.mrb[0].mxu0 %v1126
    %v1390 = vpop.f32.mrb[0].mxu0
    %v1391 = vadd.f32 %v1169, %v1390
    %v1392 = vpop.f32.mrb[0].mxu0
    %v1393 = vadd.f32 %v1173, %v1392
    %v1394 = vpop.f32.mrb[0].mxu0
    %v1395 = vadd.f32 %v1169, %v1394
    %v1396 = vpop.f32.mrb[0].mxu0
    %v1397 = vadd.f32 %v1173, %v1396
    %1398 = vmatprep.mubr.bf16.mxu0 %v1129
    %1399 = vmatmul.mubr.bf16.gmra.mrb[0].mxu0 %v1128
    %v1400 = vpop.f32.mrb[0].mxu0
    %v1401 = vadd.f32 %v1169, %v1400
    %v1402 = vpop.f32.mrb[0].mxu0
    %v1403 = vadd.f32 %v1173, %v1402
    %v1404 = vpop.f32.mrb[0].mxu0
    %v1405 = vadd.f32 %v1169, %v1404
    %v1406 = vpop.f32.mrb[0].mxu0
    %v1407 = vadd.f32 %v1173, %v1406
    %1408 = vdwg.mxu0
    %v1409 = vpack.c.bf16 %v1375, %v1371
    %v1410 = vpack.c.bf16 %v1377, %v1373
    %v1411 = vpack.c.bf16 %v1385, %v1381
    %v1412 = vpack.c.bf16 %v1387, %v1383
    %v1413 = vpack.c.bf16 %v1395, %v1391
    %v1414 = vpack.c.bf16 %v1397, %v1393
    %v1415 = vpack.c.bf16 %v1405, %v1401
    %v1416 = vpack.c.bf16 %v1407, %v1403
    %v1417 = vtanh.bf16.pop %v1409
    %v1418 = vtanh.bf16.pop %v1410
    %v1419 = vtanh.bf16.pop %v1411
    %v1420 = vtanh.bf16.pop %v1412
    %v1421 = vtanh.bf16.pop %v1413
    %v1422 = vtanh.bf16.pop %v1414
    %v1423 = vtanh.bf16.pop %v1415
    %v1424 = vtanh.bf16.pop %v1416
    %s1425 = scalar_lea.vmem [#allocation3], 1024
    %v1426 = vld [vmem:[%s1425] sm:$0xff]
    %v1427 = vld [vmem:[%s1425 + $0x8] sm:$0xff]
    %v1428 = vld [vmem:[%s1425 + $0x10] sm:$0xff]
    %v1429 = vld [vmem:[%s1425 + $0x18] sm:$0xff]
    %v1430 = vld [vmem:[%s1425 + $0x20] sm:$0xff]
    %v1431 = vld [vmem:[%s1425 + $0x28] sm:$0xff]
    %v1432 = vld [vmem:[%s1425 + $0x30] sm:$0xff]
    %v1433 = vld [vmem:[%s1425 + $0x38] sm:$0xff]
    %v1434 = vld [vmem:[%s1425 + $0x40] sm:$0xff]
    %v1435 = vld [vmem:[%s1425 + $0x48] sm:$0xff]
    %v1436 = vld [vmem:[%s1425 + $0x50] sm:$0xff]
    %v1437 = vld [vmem:[%s1425 + $0x58] sm:$0xff]
    %v1438 = vld [vmem:[%s1425 + $0x60] sm:$0xff]
    %v1439 = vld [vmem:[%s1425 + $0x68] sm:$0xff]
    %v1440 = vld [vmem:[%s1425 + $0x70] sm:$0xff]
    %v1441 = vld [vmem:[%s1425 + $0x78] sm:$0xff]
    %v1442 = vld [vmem:[%s1425 + $0x80] sm:$0xff]
    %v1443 = vld [vmem:[%s1425 + $0x88] sm:$0xff]
    %v1444 = vld [vmem:[%s1425 + $0x90] sm:$0xff]
    %v1445 = vld [vmem:[%s1425 + $0x98] sm:$0xff]
    %v1446 = vld [vmem:[%s1425 + $0xa0] sm:$0xff]
    %v1447 = vld [vmem:[%s1425 + $0xa8] sm:$0xff]
    %v1448 = vld [vmem:[%s1425 + $0xb0] sm:$0xff]
    %v1449 = vld [vmem:[%s1425 + $0xb8] sm:$0xff]
    %v1450 = vld [vmem:[%s1425 + $0xc0] sm:$0xff]
    %v1451 = vld [vmem:[%s1425 + $0xc8] sm:$0xff]
    %v1452 = vld [vmem:[%s1425 + $0xd0] sm:$0xff]
    %v1453 = vld [vmem:[%s1425 + $0xd8] sm:$0xff]
    %v1454 = vld [vmem:[%s1425 + $0xe0] sm:$0xff]
    %v1455 = vld [vmem:[%s1425 + $0xe8] sm:$0xff]
    %v1456 = vld [vmem:[%s1425 + $0xf0] sm:$0xff]
    %v1457 = vld [vmem:[%s1425 + $0xf8] sm:$0xff]
    %s1458 = scalar_lea.vmem %s4, 8
    %v1459 = vld [vmem:[%s1458] sm:$0x3]
    %v1461 = vlaneseq
    %v1462 = vshrl.u32 %v1461, 7
    %v1463 = vsub.s32 0, %v1462
    %v1464 = vrot.slane %v1459, %v1463
    %v1465 = vlaneseq
    %v1466 = vshrl.u32 %v1465, 7
    %v1467 = vsub.s32 1, %v1466
    %v1468 = vrot.slane %v1459, %v1467
    %v1503 = vunpack.c.l.b16 %v1426
    %v1504 = vunpack.c.h.b16 %v1426
    %v1505 = vunpack.c.l.b16 %v1427
    %v1506 = vunpack.c.h.b16 %v1427
    %v1507 = vunpack.c.l.b16 %v1428
    %v1508 = vunpack.c.h.b16 %v1428
    %v1509 = vunpack.c.l.b16 %v1429
    %v1510 = vunpack.c.h.b16 %v1429
    %v1511 = vunpack.c.l.b16 %v1430
    %v1512 = vunpack.c.h.b16 %v1430
    %v1513 = vunpack.c.l.b16 %v1431
    %v1514 = vunpack.c.h.b16 %v1431
    %v1515 = vunpack.c.l.b16 %v1432
    %v1516 = vunpack.c.h.b16 %v1432
    %v1517 = vunpack.c.l.b16 %v1433
    %v1518 = vunpack.c.h.b16 %v1433
    %v1519 = vunpack.c.l.b16 %v1434
    %v1520 = vunpack.c.h.b16 %v1434
    %v1521 = vunpack.c.l.b16 %v1435
    %v1522 = vunpack.c.h.b16 %v1435
    %v1523 = vunpack.c.l.b16 %v1436
    %v1524 = vunpack.c.h.b16 %v1436
    %v1525 = vunpack.c.l.b16 %v1437
    %v1526 = vunpack.c.h.b16 %v1437
    %v1527 = vunpack.c.l.b16 %v1438
    %v1528 = vunpack.c.h.b16 %v1438
    %v1529 = vunpack.c.l.b16 %v1439
    %v1530 = vunpack.c.h.b16 %v1439
    %v1531 = vunpack.c.l.b16 %v1440
    %v1532 = vunpack.c.h.b16 %v1440
    %v1533 = vunpack.c.l.b16 %v1441
    %v1534 = vunpack.c.h.b16 %v1441
    %v1535 = vunpack.c.l.b16 %v1442
    %v1536 = vunpack.c.h.b16 %v1442
    %v1537 = vunpack.c.l.b16 %v1443
    %v1538 = vunpack.c.h.b16 %v1443
    %v1539 = vunpack.c.l.b16 %v1444
    %v1540 = vunpack.c.h.b16 %v1444
    %v1541 = vunpack.c.l.b16 %v1445
    %v1542 = vunpack.c.h.b16 %v1445
    %v1543 = vunpack.c.l.b16 %v1446
    %v1544 = vunpack.c.h.b16 %v1446
    %v1545 = vunpack.c.l.b16 %v1447
    %v1546 = vunpack.c.h.b16 %v1447
    %v1547 = vunpack.c.l.b16 %v1448
    %v1548 = vunpack.c.h.b16 %v1448
    %v1549 = vunpack.c.l.b16 %v1449
    %v1550 = vunpack.c.h.b16 %v1449
    %v1551 = vunpack.c.l.b16 %v1450
    %v1552 = vunpack.c.h.b16 %v1450
    %v1553 = vunpack.c.l.b16 %v1451
    %v1554 = vunpack.c.h.b16 %v1451
    %v1555 = vunpack.c.l.b16 %v1452
    %v1556 = vunpack.c.h.b16 %v1452
    %v1557 = vunpack.c.l.b16 %v1453
    %v1558 = vunpack.c.h.b16 %v1453
    %v1559 = vunpack.c.l.b16 %v1454
    %v1560 = vunpack.c.h.b16 %v1454
    %v1561 = vunpack.c.l.b16 %v1455
    %v1562 = vunpack.c.h.b16 %v1455
    %v1563 = vunpack.c.l.b16 %v1456
    %v1564 = vunpack.c.h.b16 %v1456
    %v1565 = vunpack.c.l.b16 %v1457
    %v1566 = vunpack.c.h.b16 %v1457
    %v1567 = vpack.c.b16 %v1505, %v1503
    %v1568 = vpack.c.b16 %v1506, %v1504
    %v1569 = vpack.c.b16 %v1509, %v1507
    %v1570 = vpack.c.b16 %v1510, %v1508
    %v1571 = vpack.c.b16 %v1513, %v1511
    %v1572 = vpack.c.b16 %v1514, %v1512
    %v1573 = vpack.c.b16 %v1517, %v1515
    %v1574 = vpack.c.b16 %v1518, %v1516
    %v1575 = vpack.c.b16 %v1521, %v1519
    %v1576 = vpack.c.b16 %v1522, %v1520
    %v1577 = vpack.c.b16 %v1525, %v1523
    %v1578 = vpack.c.b16 %v1526, %v1524
    %v1579 = vpack.c.b16 %v1529, %v1527
    %v1580 = vpack.c.b16 %v1530, %v1528
    %v1581 = vpack.c.b16 %v1533, %v1531
    %v1582 = vpack.c.b16 %v1534, %v1532
    %v1583 = vpack.c.b16 %v1537, %v1535
    %v1584 = vpack.c.b16 %v1538, %v1536
    %v1585 = vpack.c.b16 %v1541, %v1539
    %v1586 = vpack.c.b16 %v1542, %v1540
    %v1587 = vpack.c.b16 %v1545, %v1543
    %v1588 = vpack.c.b16 %v1546, %v1544
    %v1589 = vpack.c.b16 %v1549, %v1547
    %v1590 = vpack.c.b16 %v1550, %v1548
    %v1591 = vpack.c.b16 %v1553, %v1551
    %v1592 = vpack.c.b16 %v1554, %v1552
    %v1593 = vpack.c.b16 %v1557, %v1555
    %v1594 = vpack.c.b16 %v1558, %v1556
    %v1595 = vpack.c.b16 %v1561, %v1559
    %v1596 = vpack.c.b16 %v1562, %v1560
    %v1597 = vpack.c.b16 %v1565, %v1563
    %v1598 = vpack.c.b16 %v1566, %v1564
    %1631 = vmatprep.subr.bf16.mxu0 %v1568
    %1632 = vmatpush1.bf16.msra.mxu0 %v1567
    %1633 = vmatprep.subr.bf16.mxu0 %v1570
    %1634 = vmatpush1.bf16.msra.mxu0 %v1569
    %1635 = vmatprep.subr.bf16.mxu0 %v1572
    %1636 = vmatpush1.bf16.msra.mxu0 %v1571
    %1637 = vmatprep.subr.bf16.mxu0 %v1574
    %1638 = vmatpush1.bf16.msra.mxu0 %v1573
    %1639 = vmatprep.subr.bf16.mxu0 %v1576
    %1640 = vmatpush1.bf16.msra.mxu0 %v1575
    %1641 = vmatprep.subr.bf16.mxu0 %v1578
    %1642 = vmatpush1.bf16.msra.mxu0 %v1577
    %1643 = vmatprep.subr.bf16.mxu0 %v1580
    %1644 = vmatpush1.bf16.msra.mxu0 %v1579
    %1645 = vmatprep.subr.bf16.mxu0 %v1582
    %1646 = vmatpush1.bf16.msra.mxu0 %v1581
    %1647 = vmatprep.subr.bf16.mxu0 %v1584
    %1648 = vmatpush1.bf16.msra.mxu0 %v1583
    %1649 = vmatprep.subr.bf16.mxu0 %v1586
    %1650 = vmatpush1.bf16.msra.mxu0 %v1585
    %1651 = vmatprep.subr.bf16.mxu0 %v1588
    %1652 = vmatpush1.bf16.msra.mxu0 %v1587
    %1653 = vmatprep.subr.bf16.mxu0 %v1590
    %1654 = vmatpush1.bf16.msra.mxu0 %v1589
    %1655 = vmatprep.subr.bf16.mxu0 %v1592
    %1656 = vmatpush1.bf16.msra.mxu0 %v1591
    %1657 = vmatprep.subr.bf16.mxu0 %v1594
    %1658 = vmatpush1.bf16.msra.mxu0 %v1593
    %1659 = vmatprep.subr.bf16.mxu0 %v1596
    %1660 = vmatpush1.bf16.msra.mxu0 %v1595
    %1661 = vmatprep.subr.bf16.mxu0 %v1598
    %1662 = vmatpush1.bf16.msra.mxu0 %v1597
    %1663 = vmatprep.mubr.bf16.mxu0 %v1418
    %1664 = vmatmul.mubr.bf16.gmra.mrb[0].mxu0 %v1417
    %v1665 = vpop.f32.mrb[0].mxu0
    %v1666 = vadd.f32 %v1464, %v1665
    %v1667 = vpop.f32.mrb[0].mxu0
    %v1668 = vadd.f32 %v1468, %v1667
    %v1669 = vpop.f32.mrb[0].mxu0
    %v1670 = vadd.f32 %v1464, %v1669
    %v1671 = vpop.f32.mrb[0].mxu0
    %v1672 = vadd.f32 %v1468, %v1671
    %1673 = vmatprep.mubr.bf16.mxu0 %v1420
    %1674 = vmatmul.mubr.bf16.gmra.mrb[0].mxu0 %v1419
    %v1675 = vpop.f32.mrb[0].mxu0
    %v1676 = vadd.f32 %v1464, %v1675
    %v1677 = vpop.f32.mrb[0].mxu0
    %v1678 = vadd.f32 %v1468, %v1677
    %v1679 = vpop.f32.mrb[0].mxu0
    %v1680 = vadd.f32 %v1464, %v1679
    %v1681 = vpop.f32.mrb[0].mxu0
    %v1682 = vadd.f32 %v1468, %v1681
    %1683 = vmatprep.mubr.bf16.mxu0 %v1422
    %1684 = vmatmul.mubr.bf16.gmra.mrb[0].mxu0 %v1421
    %v1685 = vpop.f32.mrb[0].mxu0
    %v1686 = vadd.f32 %v1464, %v1685
    %v1687 = vpop.f32.mrb[0].mxu0
    %v1688 = vadd.f32 %v1468, %v1687
    %v1689 = vpop.f32.mrb[0].mxu0
    %v1690 = vadd.f32 %v1464, %v1689
    %v1691 = vpop.f32.mrb[0].mxu0
    %v1692 = vadd.f32 %v1468, %v1691
    %1693 = vmatprep.mubr.bf16.mxu0 %v1424
    %1694 = vmatmul.mubr.bf16.gmra.mrb[0].mxu0 %v1423
    %v1695 = vpop.f32.mrb[0].mxu0
    %v1696 = vadd.f32 %v1464, %v1695
    %v1697 = vpop.f32.mrb[0].mxu0
    %v1698 = vadd.f32 %v1468, %v1697
    %v1699 = vpop.f32.mrb[0].mxu0
    %v1700 = vadd.f32 %v1464, %v1699
    %v1701 = vpop.f32.mrb[0].mxu0
    %v1702 = vadd.f32 %v1468, %v1701
    %1703 = vdwg.mxu0
    %v1704 = vpack.c.bf16 %v1670, %v1666
    %v1705 = vpack.c.bf16 %v1672, %v1668
    %v1706 = vpack.c.bf16 %v1680, %v1676
    %v1707 = vpack.c.bf16 %v1682, %v1678
    %v1708 = vpack.c.bf16 %v1690, %v1686
    %v1709 = vpack.c.bf16 %v1692, %v1688
    %v1710 = vpack.c.bf16 %v1700, %v1696
    %v1711 = vpack.c.bf16 %v1702, %v1698
    %v1712 = vtanh.bf16.pop %v1704
    %v1713 = vtanh.bf16.pop %v1705
    %v1714 = vtanh.bf16.pop %v1706
    %v1715 = vtanh.bf16.pop %v1707
    %v1716 = vtanh.bf16.pop %v1708
    %v1717 = vtanh.bf16.pop %v1709
    %v1718 = vtanh.bf16.pop %v1710
    %v1719 = vtanh.bf16.pop %v1711
    %v1720 = vunpack.c.l.bf16 %v1712
    %v1721 = vunpack.c.l.bf16 %v1713
    %v1722 = vunpack.c.h.bf16 %v1712
    %v1723 = vunpack.c.h.bf16 %v1713
    %v1724 = vunpack.c.l.bf16 %v1714
    %v1725 = vunpack.c.l.bf16 %v1715
    %v1726 = vunpack.c.h.bf16 %v1714
    %v1727 = vunpack.c.h.bf16 %v1715
    %v1728 = vunpack.c.l.bf16 %v1716
    %v1729 = vunpack.c.l.bf16 %v1717
    %v1730 = vunpack.c.h.bf16 %v1716
    %v1731 = vunpack.c.h.bf16 %v1717
    %v1732 = vunpack.c.l.bf16 %v1718
    %v1733 = vunpack.c.l.bf16 %v1719
    %v1734 = vunpack.c.h.bf16 %v1718
    %v1735 = vunpack.c.h.bf16 %v1719
    %v1736 = vld [vmem:[%s5] sm:$0x3]
    %v1738 = vlaneseq
    %v1739 = vshrl.u32 %v1738, 7
    %v1740 = vsub.s32 0, %v1739
    %v1741 = vrot.slane %v1736, %v1740
    %v1742 = vlaneseq
    %v1743 = vshrl.u32 %v1742, 7
    %v1744 = vsub.s32 1, %v1743
    %v1745 = vrot.slane %v1736, %v1744
    %v1748 = vmul.f32 %v1720, %v1741
    %v1749 = vmul.f32 %v1721, %v1745
    %v1750 = vmul.f32 %v1722, %v1741
    %v1751 = vmul.f32 %v1723, %v1745
    %v1752 = vmul.f32 %v1724, %v1741
    %v1753 = vmul.f32 %v1725, %v1745
    %v1754 = vmul.f32 %v1726, %v1741
    %v1755 = vmul.f32 %v1727, %v1745
    %v1756 = vmul.f32 %v1728, %v1741
    %v1757 = vmul.f32 %v1729, %v1745
    %v1758 = vmul.f32 %v1730, %v1741
    %v1759 = vmul.f32 %v1731, %v1745
    %v1760 = vmul.f32 %v1732, %v1741
    %v1761 = vmul.f32 %v1733, %v1745
    %v1762 = vmul.f32 %v1734, %v1741
    %v1763 = vmul.f32 %v1735, %v1745
    %v1764 = vadd.f32 %v1748, %v1749
    %1765 = vadd.xlane.f32.xlu0 %v1764
    %v1766 = vpop.xlane.xlu0 %1765
    %v1767 = vadd.f32 %v1750, %v1751
    %1768 = vadd.xlane.f32.xlu0 %v1767
    %v1769 = vpop.xlane.xlu0 %1768
    %v1770 = vadd.f32 %v1752, %v1753
    %1771 = vadd.xlane.f32.xlu0 %v1770
    %v1772 = vpop.xlane.xlu0 %1771
    %v1773 = vadd.f32 %v1754, %v1755
    %1774 = vadd.xlane.f32.xlu0 %v1773
    %v1775 = vpop.xlane.xlu0 %1774
    %v1776 = vadd.f32 %v1756, %v1757
    %1777 = vadd.xlane.f32.xlu0 %v1776
    %v1778 = vpop.xlane.xlu0 %1777
    %v1779 = vadd.f32 %v1758, %v1759
    %1780 = vadd.xlane.f32.xlu0 %v1779
    %v1781 = vpop.xlane.xlu0 %1780
    %v1782 = vadd.f32 %v1760, %v1761
    %1783 = vadd.xlane.f32.xlu0 %v1782
    %v1784 = vpop.xlane.xlu0 %1783
    %v1785 = vadd.f32 %v1762, %v1763
    %1786 = vadd.xlane.f32.xlu0 %v1785
    %v1787 = vpop.xlane.xlu0 %1786
    %s1788 = sld [smem:[#allocation2]]
    %v1789 = vstv %s1788
    %v1790 = vadd.f32 %v1766, %v1789
    %v1791 = vadd.f32 %v1769, %v1789
    %v1792 = vadd.f32 %v1772, %v1789
    %v1793 = vadd.f32 %v1775, %v1789
    %v1794 = vadd.f32 %v1778, %v1789
    %v1795 = vadd.f32 %v1781, %v1789
    %v1796 = vadd.f32 %v1784, %v1789
    %v1797 = vadd.f32 %v1787, %v1789
    %v1806 = vlaneseq
    %v1807 = vand.u32 %v1806, 127
    %v1808 = vlaneseq
    %v1809 = vshrl.u32 %v1808, 7
    %v1810 = vsub.s32 %v1807, %v1809
    %v1811 = vrot.slane %v1790, %v1810
    %v1812 = vadd.s32 %v1807, 4294967288
    %v1813 = vlaneseq
    %v1814 = vshrl.u32 %v1813, 7
    %v1815 = vsub.s32 %v1812, %v1814
    %v1816 = vrot.slane %v1791, %v1815
    %vm1817 = vcmask 130112
    %v1818 = vsel %vm1817, %v1816, %v1811
    %v1819 = vadd.s32 %v1807, 4294967280
    %v1820 = vlaneseq
    %v1821 = vshrl.u32 %v1820, 7
    %v1822 = vsub.s32 %v1819, %v1821
    %v1823 = vrot.slane %v1792, %v1822
    %vm1824 = vcmask 195712
    %v1825 = vsel %vm1824, %v1823, %v1818
    %v1826 = vadd.s32 %v1807, 4294967272
    %v1827 = vlaneseq
    %v1828 = vshrl.u32 %v1827, 7
    %v1829 = vsub.s32 %v1826, %v1828
    %v1830 = vrot.slane %v1793, %v1829
    %vm1831 = vcmask 261312
    %v1832 = vsel %vm1831, %v1830, %v1825
    %v1833 = vadd.s32 %v1807, 4294967264
    %v1834 = vlaneseq
    %v1835 = vshrl.u32 %v1834, 7
    %v1836 = vsub.s32 %v1833, %v1835
    %v1837 = vrot.slane %v1794, %v1836
    %vm1838 = vcmask 326912
    %v1839 = vsel %vm1838, %v1837, %v1832
    %v1840 = vadd.s32 %v1807, 4294967256
    %v1841 = vlaneseq
    %v1842 = vshrl.u32 %v1841, 7
    %v1843 = vsub.s32 %v1840, %v1842
    %v1844 = vrot.slane %v1795, %v1843
    %vm1845 = vcmask 392512
    %v1846 = vsel %vm1845, %v1844, %v1839
    %v1847 = vadd.s32 %v1807, 4294967248
    %v1848 = vlaneseq
    %v1849 = vshrl.u32 %v1848, 7
    %v1850 = vsub.s32 %v1847, %v1849
    %v1851 = vrot.slane %v1796, %v1850
    %vm1852 = vcmask 458112
    %v1853 = vsel %vm1852, %v1851, %v1846
    %v1854 = vadd.s32 %v1807, 4294967240
    %v1855 = vlaneseq
    %v1856 = vshrl.u32 %v1855, 7
    %v1857 = vsub.s32 %v1854, %v1856
    %v1858 = vrot.slane %v1797, %v1857
    %vm1859 = vcmask 523712
    %v1860 = vsel %vm1859, %v1858, %v1853
    %vm1862 = vcmask 516096
    %1863 = vst.msk [vmem:[#allocation6] sm:$0x1] %vm1862, %v1860
    // Predicated region
    $region34: #{tpu_custom_call.1} parent=1 // pred_check
      _
    $region35: #{tpu_custom_call.1} parent=1 // pred_check_branch
      %1865 = sbr.rel (0) target = $region37
    $region36: #{tpu_custom_call.1} parent=1 // pred_region
      %s1867 = ssub.s32 16, 16
      %1868 = vsyncadd [#allocation5], %s1867
      %s1870 = sshll.u32 [#allocation6], 4
      %s1871 = int_to_ptr.vmem [resolvable:$true] %s1870
      %1873 = dma.vmem_to_hbm [thread:$0]  %s1871, 16, %s7, [#allocation5]
    $region37: #{tpu_custom_call.1} parent=1 // pred_fallthru
      _
    // Predicated region
    $region38: #{tpu_custom_call.1} parent=1 // pred_check
      _
    $region39: #{tpu_custom_call.1} parent=1 // pred_check_branch
      %1875 = sbr.rel (0) target = $region41
    $region40: #{tpu_custom_call.1} parent=1 // pred_region
      %1876 = dma.done [#allocation5], 16
    $region41: #{tpu_custom_call.1} parent=1 // pred_fallthru
      _
    %1877 = vsyncpa [#allocation4], 1
    %1878 = vsyncpa [#allocation5], 1

</llo_original>
